<compile_context>
chip_gen: v6e
topology: v6e:2x2x1
jax: 0.10.0
libtpu: 0.0.40
codegen_flags: <defaults>
</compile_context>

<pallas_src>
import functools

import jax
import jax.numpy as jnp
from jax.experimental import pallas as pl
from jax.experimental.pallas import tpu as pltpu

_SQRT_HALF = 0.7071067811865476
_MIB = 1024 * 1024


def _round_up(a, b):
    return (a + b - 1) // b * b


def _gelu(x, approximate):
    if approximate:
        # tanh approximation -> EUP (otherwise-idle bundle slot); opt-in,
        # slightly different numerics than nn.GELU().
        return jax.nn.gelu(x, approximate=True)
    # PyTorch nn.GELU() default: exact erf-based GELU.
    return 0.5 * x * (1.0 + jax.lax.erf(x * jnp.float32(_SQRT_HALF)))


def _vmem_capacity_bytes():
    try:
        info = pltpu.get_tpu_info()
        cap = getattr(info, "vmem_capacity_bytes", None)
        if cap:
            return int(cap)
    except Exception:
        pass
    return 64 * _MIB  # conservative default: v7x per-TensorCore VMEM


# ---------------------------------------------------------------------------
# Kernels
# ---------------------------------------------------------------------------

def _mlp_kernel_fused(x_ref, w1_ref, b1_ref, w2_ref, b2_ref, o_ref, *,
                      approximate):
    """Whole hidden dim resident (n_h == 1): direct store, no accumulator."""
    h = jnp.dot(x_ref[...], w1_ref[...], preferred_element_type=jnp.float32)
    h = _gelu(h + b1_ref[...].astype(jnp.float32), approximate)
    y = jnp.dot(h.astype(w2_ref.dtype), w2_ref[...],
                preferred_element_type=jnp.float32)
    # drop1 / drop2: p = 0.0 -> identity.
    o_ref[...] = (y + b2_ref[...].astype(jnp.float32)).astype(o_ref.dtype)


def _mlp_kernel_tiled(x_ref, w1_ref, b1_ref, w2_ref, b2_ref, o_ref, acc_ref, *,
                      approximate):
    """Hidden dim tiled: grid axis 1 is the reduction over hidden slices."""
    j = pl.program_id(1)
    h = jnp.dot(x_ref[...], w1_ref[...], preferred_element_type=jnp.float32)
    h = _gelu(h + b1_ref[...].astype(jnp.float32), approximate)
    part = jnp.dot(h.astype(w2_ref.dtype), w2_ref[...],
                   preferred_element_type=jnp.float32)

    @pl.when(j == 0)
    def _():
        acc_ref[...] = part              # assign, not zero-init + RMW

    @pl.when(j > 0)
    def _():
        acc_ref[...] += part

    @pl.when(j == pl.num_programs(1) - 1)
    def _():
        o_ref[...] = (acc_ref[...] + b2_ref[...].astype(jnp.float32)
                      ).astype(o_ref.dtype)


# ---------------------------------------------------------------------------
# Wrapper
# ---------------------------------------------------------------------------

def pad_mlp_params(w1, b1, w2, b2, dtype=None):
    """Pad weights/biases to lane-dense (multiple-of-128) shapes ONCE, outside
    the per-call hot path; optionally cast (bf16 recommended for the MXU)."""
    if dtype is not None:
        w1, b1, w2, b2 = (a.astype(dtype) for a in (w1, b1, w2, b2))
    c_in, h = w1.shape
    c_out = w2.shape[1]
    c_in_p, h_p, c_out_p = (_round_up(d, 128) for d in (c_in, h, c_out))
    w1p = jnp.pad(w1, ((0, c_in_p - c_in), (0, h_p - h)))
    b1p = jnp.pad(b1.reshape(1, -1), ((0, 0), (0, h_p - h)))
    w2p = jnp.pad(w2, ((0, h_p - h), (0, c_out_p - c_out)))
    b2p = jnp.pad(b2.reshape(1, -1), ((0, 0), (0, c_out_p - c_out)))
    return w1p, b1p, w2p, b2p


@functools.partial(jax.jit,
                   static_argnames=("out_features", "tm", "th", "approx_gelu"))
def mlp_forward(x, w1, b1, w2, b2, *, out_features=None, tm=512, th=None,
                approx_gelu=False):
    """x: (..., C_in) -> (..., C_out).

    Weights are stored transposed: w1 (C_in, H), w2 (H, C_out); biases b1 (H,)
    / b2 (C_out,).  Weights may be pre-padded with `pad_mlp_params` (pad +
    bf16-cast once outside the hot path); pass `out_features` to recover the
    unpadded output width in that case.  th=None auto-selects: the whole
    hidden dim if the weights fit the VMEM budget, else the largest hidden
    tile that does.
    """
    *lead, c_in = x.shape
    m = 1
    for d in lead:
        m *= d
    c_out_stored = w2.shape[1]
    c_out = c_out_stored if out_features is None else out_features
    h_base = w1.shape[1]

    c_in_p = _round_up(max(c_in, w1.shape[0]), 128)
    c_out_p = _round_up(c_out_stored, 128)
    h_full = _round_up(h_base, 128)

    x_bytes = x.dtype.itemsize
    w_bytes = w1.dtype.itemsize
    cap = _vmem_capacity_bytes()
    budget = int(cap * 0.7)  # leave headroom for compiler scratch / regalloc

    def resident(tm_, th_, n_h_):
        w_bufs = 1 if n_h_ == 1 else 3          # Buffered(3) when streaming
        weights = (c_in_p * th_ + th_ * c_out_p + th_ + c_out_p) * w_bytes * w_bufs
        io = 2 * tm_ * c_in_p * x_bytes + 2 * tm_ * c_out_p * x_bytes
        hidden = tm_ * th_ * 4                  # f32 fc1 intermediate
        acc = 0 if n_h_ == 1 else tm_ * c_out_p * 4
        return weights + io + hidden + acc

    # ---- tile selection (all static / trace-time) ----
    tm0 = max(16, min(_round_up(tm, 16), _round_up(m, 16)))
    if th is not None:
        th_sel = _round_up(min(th, h_full), 128)
        h_p = _round_up(h_base, th_sel)
        tm_sel = tm0
    else:
        tm_sel = th_sel = h_p = None
        # Prefer keeping the whole hidden dim resident (no weight re-stream),
        # shrinking the token tile if needed.
        t = tm0
        while t >= 128:
            if resident(t, h_full, 1) <= budget:
                tm_sel, th_sel, h_p = t, h_full, h_full
                break
            t //= 2
        if th_sel is None:
            # Fall back to hidden-dim tiling (very large C / f32 weights).
            t = tm0
            while th_sel is None:
                for cand in (c for c in (2048, 1024, 512, 256, 128) if c < h_full):
                    hp_c = _round_up(h_base, cand)
                    if resident(t, cand, hp_c // cand) <= budget:
                        tm_sel, th_sel, h_p = t, cand, hp_c
                        break
                if th_sel is None:
                    if t <= 64:
                        tm_sel, th_sel = t, 128
                        h_p = _round_up(h_base, 128)
                    else:
                        t //= 2
    tm, th = tm_sel, th_sel

    m_p = _round_up(m, tm)
    n_m = m_p // tm
    n_h = h_p // th

    def pad2(a, rows, cols):
        pr, pc = rows - a.shape[0], cols - a.shape[1]
        return a if (pr == 0 and pc == 0) else jnp.pad(a, ((0, pr), (0, pc)))

    # Zero-width pads are skipped (pre-padded / aligned inputs cost nothing).
    x2 = pad2(x.reshape(m, c_in), m_p, c_in_p)
    w1p = pad2(w1, c_in_p, h_p)
    b1p = pad2(b1.reshape(1, -1), 1, h_p)
    w2p = pad2(w2, h_p, c_out_p)
    b2p = pad2(b2.reshape(1, -1), 1, c_out_p)

    if n_h == 1:
        # Fast path: weights resident for the whole (megacore-shardable) M
        # sweep, no accumulator round-trip through VMEM.
        kernel = functools.partial(_mlp_kernel_fused, approximate=approx_gelu)
        grid = (n_m,)
        in_specs = [
            pl.BlockSpec((tm, c_in_p), lambda i: (i, 0)),
            pl.BlockSpec((c_in_p, th), lambda i: (0, 0)),
            pl.BlockSpec((1, th), lambda i: (0, 0)),
            pl.BlockSpec((th, c_out_p), lambda i: (0, 0)),
            pl.BlockSpec((1, c_out_p), lambda i: (0, 0)),
        ]
        out_specs = pl.BlockSpec((tm, c_out_p), lambda i: (i, 0))
        scratch = []
        dims = ("parallel",)
    else:
        # Hidden-dim reduction (only when weights would not fit the budget).
        # Streamed weight slices get a 3rd buffer to hide the (i -> i+1,
        # j -> 0) refetch bubble.
        kernel = functools.partial(_mlp_kernel_tiled, approximate=approx_gelu)
        grid = (n_m, n_h)
        stream = pl.Buffered(3)
        in_specs = [
            pl.BlockSpec((tm, c_in_p), lambda i, j: (i, 0)),
            pl.BlockSpec((c_in_p, th), lambda i, j: (0, j), pipeline_mode=stream),
            pl.BlockSpec((1, th), lambda i, j: (0, j)),
            pl.BlockSpec((th, c_out_p), lambda i, j: (j, 0), pipeline_mode=stream),
            pl.BlockSpec((1, c_out_p), lambda i, j: (0, 0)),
        ]
        out_specs = pl.BlockSpec((tm, c_out_p), lambda i, j: (i, 0))
        scratch = [pltpu.VMEM((tm, c_out_p), jnp.float32)]
        dims = ("parallel", "arbitrary")

    vmem_limit = int(min(cap * 0.9,
                         max(resident(tm, th, n_h) * 5 // 4, 32 * _MIB)))

    out = pl.pallas_call(
        kernel,
        out_shape=jax.ShapeDtypeStruct((m_p, c_out_p), x.dtype),
        grid_spec=pltpu.PrefetchScalarGridSpec(
            num_scalar_prefetch=0,
            grid=grid,
            in_specs=in_specs,
            out_specs=out_specs,
            scratch_shapes=scratch,
        ),
        compiler_params=pltpu.CompilerParams(
            # "parallel" token axis -> megacore-shardable.  v7x note: verify
            # the M axis actually splits across the 2 TensorCores.
            dimension_semantics=dims,
            vmem_limit_bytes=vmem_limit,
        ),
    )(x2, w1p, b1p, w2p, b2p)

    return out[:m, :c_out].reshape(*lead, c_out)


# ---------------------------------------------------------------------------
# Init + reference + self-test
# ---------------------------------------------------------------------------

def init_mlp_params(key, in_features, hidden_features, out_features,
                    dtype=jnp.float32):
    """nn.Linear-style init; weights stored transposed as (in, out)."""
    k1, k2, k3, k4 = jax.random.split(key, 4)
    bound1 = 1.0 / jnp.sqrt(in_features)
    bound2 = 1.0 / jnp.sqrt(hidden_features)
    w1 = jax.random.uniform(k1, (in_features, hidden_features),
                            minval=-bound1, maxval=bound1, dtype=dtype)
    b1 = jax.random.uniform(k2, (hidden_features,),
                            minval=-bound1, maxval=bound1, dtype=dtype)
    w2 = jax.random.uniform(k3, (hidden_features, out_features),
                            minval=-bound2, maxval=bound2, dtype=dtype)
    b2 = jax.random.uniform(k4, (out_features,),
                            minval=-bound2, maxval=bound2, dtype=dtype)
    return w1, b1, w2, b2


def mlp_reference(x, w1, b1, w2, b2):
    """Plain-JAX reference (same math as the PyTorch module, drop=0)."""
    hp = jax.lax.Precision.HIGHEST
    h = jnp.matmul(x, w1, precision=hp) + b1.reshape(-1)
    h = 0.5 * h * (1.0 + jax.lax.erf(h * jnp.float32(_SQRT_HALF)))
    return jnp.matmul(h, w2, precision=hp) + b2.reshape(-1)


if __name__ == "__main__":
    key = jax.random.PRNGKey(0)
    kx, kp, kx2, kp2 = jax.random.split(key, 4)

    # --- Case 1: lane-aligned shapes, default auto tiling (fused, th = H). ---
    B, N, C = 2, 128, 128
    H = 4 * C
    x = jax.random.normal(kx, (B, N, C), dtype=jnp.float32)
    w1, b1, w2, b2 = init_mlp_params(kp, C, H, C)
    y_ref = mlp_reference(x, w1, b1, w2, b2)

    y = jax.block_until_ready(mlp_forward(x, w1, b1, w2, b2))
    assert jnp.allclose(y, y_ref, atol=1e-3, rtol=1e-3), "f32 fused mismatch"

    # --- Case 2: forced hidden-dim tiling (exercises the reduction path). ---
    y2 = jax.block_until_ready(mlp_forward(x, w1, b1, w2, b2, tm=128, th=256))
    assert jnp.allclose(y2, y_ref, atol=1e-3, rtol=1e-3), "H-tiled mismatch"

    # --- Case 3: bf16 weights/activations, padding/cast hoisted out of call. -
    xb = x.astype(jnp.bfloat16)
    w1b, b1b, w2b, b2b = pad_mlp_params(w1, b1, w2, b2, dtype=jnp.bfloat16)
    yb = jax.block_until_ready(
        mlp_forward(xb, w1b, b1b, w2b, b2b, out_features=C))
    assert jnp.allclose(yb.astype(jnp.float32), y_ref, atol=5e-2, rtol=5e-2), \
        "bf16 mismatch"

    # --- Case 4: Swin-stage-like unaligned dims (C=96 -> padded to 128). ---
    B2, N2, C2 = 2, 100, 96
    H2 = 4 * C2
    x4 = jax.random.normal(kx2, (B2, N2, C2), dtype=jnp.float32)
    p4 = init_mlp_params(kp2, C2, H2, C2)
    y4_ref = mlp_reference(x4, *p4)
    y4 = jax.block_until_ready(mlp_forward(x4, *p4))
    assert jnp.allclose(y4, y4_ref, atol=1e-3, rtol=1e-3), "unaligned mismatch"

    print("KERNEL_OK")
</pallas_src>

<mosaic_0001>
module attributes {stable_mosaic.version = 11 : i64} {
  func.func @_mlp_kernel_fused(%arg0: i32, %arg1: memref<256x128xf32, #tpu.memory_space<vmem>>, %arg2: memref<128x512xf32, #tpu.memory_space<vmem>>, %arg3: memref<1x512xf32, #tpu.memory_space<vmem>>, %arg4: memref<512x128xf32, #tpu.memory_space<vmem>>, %arg5: memref<1x128xf32, #tpu.memory_space<vmem>>, %arg6: memref<256x128xf32, #tpu.memory_space<vmem>>) attributes {dimension_semantics = [#tpu.dimension_semantics<parallel>], iteration_bounds = array<i64: 1>, scalar_prefetch = 0 : i64, scratch_operands = 0 : i64, tpu.core_type = #tpu.core_type<tc>, window_params = [{transform_indices = @transform_0, window_bounds = array<i64: 256, 128>}, {pipeline_mode = #tpu.pipeline_mode<synchronous>, transform_indices = @transform_1, window_bounds = array<i64: 128, 512>}, {pipeline_mode = #tpu.pipeline_mode<synchronous>, transform_indices = @transform_2, window_bounds = array<i64: 1, 512>}, {pipeline_mode = #tpu.pipeline_mode<synchronous>, transform_indices = @transform_3, window_bounds = array<i64: 512, 128>}, {pipeline_mode = #tpu.pipeline_mode<synchronous>, transform_indices = @transform_4, window_bounds = array<i64: 1, 128>}, {transform_indices = @transform_5, window_bounds = array<i64: 256, 128>}]} {
    %c0 = arith.constant 0 : index
    %c0_0 = arith.constant 0 : index
    %0 = vector.load %arg1[%c0, %c0_0] : memref<256x128xf32, #tpu.memory_space<vmem>>, vector<256x128xf32>
    %c0_1 = arith.constant 0 : index
    %c0_2 = arith.constant 0 : index
    %1 = vector.load %arg2[%c0_1, %c0_2] : memref<128x512xf32, #tpu.memory_space<vmem>>, vector<128x512xf32>
    %cst = arith.constant dense<0.000000e+00> : vector<256x512xf32>
    %2 = tpu.matmul %0, %1, %cst {dimension_numbers = #tpu.dot_dimension_numbers<[1], [0], [0], [1], [0, 0, 1, 1], [], []>} : vector<256x128xf32>, vector<128x512xf32>, vector<256x512xf32> -> vector<256x512xf32>
    %c0_3 = arith.constant 0 : index
    %c0_4 = arith.constant 0 : index
    %3 = vector.load %arg3[%c0_3, %c0_4] : memref<1x512xf32, #tpu.memory_space<vmem>>, vector<1x512xf32>
    %4 = vector.broadcast %3 : vector<1x512xf32> to vector<256x512xf32>
    %5 = arith.addf %2, %4 : vector<256x512xf32>
    %cst_5 = arith.constant 5.000000e-01 : f32
    %6 = vector.broadcast %cst_5 : f32 to vector<256x512xf32>
    %7 = arith.mulf %6, %5 : vector<256x512xf32>
    %cst_6 = arith.constant 0.707106769 : f32
    %8 = vector.broadcast %cst_6 : f32 to vector<256x512xf32>
    %9 = arith.mulf %5, %8 : vector<256x512xf32>
    %10 = math.erf %9 : vector<256x512xf32>
    %cst_7 = arith.constant 1.000000e+00 : f32
    %11 = vector.broadcast %cst_7 : f32 to vector<256x512xf32>
    %12 = arith.addf %11, %10 : vector<256x512xf32>
    %13 = arith.mulf %7, %12 : vector<256x512xf32>
    %c0_8 = arith.constant 0 : index
    %c0_9 = arith.constant 0 : index
    %14 = vector.load %arg4[%c0_8, %c0_9] : memref<512x128xf32, #tpu.memory_space<vmem>>, vector<512x128xf32>
    %cst_10 = arith.constant dense<0.000000e+00> : vector<256x128xf32>
    %15 = tpu.matmul %13, %14, %cst_10 {dimension_numbers = #tpu.dot_dimension_numbers<[1], [0], [0], [1], [0, 0, 1, 1], [], []>} : vector<256x512xf32>, vector<512x128xf32>, vector<256x128xf32> -> vector<256x128xf32>
    %c0_11 = arith.constant 0 : index
    %c0_12 = arith.constant 0 : index
    %16 = vector.load %arg5[%c0_11, %c0_12] : memref<1x128xf32, #tpu.memory_space<vmem>>, vector<1x128xf32>
    %17 = vector.broadcast %16 : vector<1x128xf32> to vector<256x128xf32>
    %18 = arith.addf %15, %17 : vector<256x128xf32>
    %c0_13 = arith.constant 0 : index
    %c0_14 = arith.constant 0 : index
    %19 = vector.load %arg6[%c0_13, %c0_14] : memref<256x128xf32, #tpu.memory_space<vmem>>, vector<256x128xf32>
    tpu.vector_store %arg6[%c0_13, %c0_14], %18 {strides = array<i32>} : memref<256x128xf32, #tpu.memory_space<vmem>>, vector<256x128xf32>,
    return
  }
  func.func @transform_0(%arg0: i32) -> (i32, i32) {
    %c0_i32 = arith.constant 0 : i32
    %c0_i32_0 = arith.constant 0 : i32
    return %arg0, %c0_i32 : i32, i32
  }
  func.func @transform_1(%arg0: i32) -> (i32, i32) {
    %c0_i32 = arith.constant 0 : i32
    %c0_i32_0 = arith.constant 0 : i32
    %c0_i32_1 = arith.constant 0 : i32
    return %c0_i32, %c0_i32_0 : i32, i32
  }
  func.func @transform_2(%arg0: i32) -> (i32, i32) {
    %c0_i32 = arith.constant 0 : i32
    %c0_i32_0 = arith.constant 0 : i32
    %c0_i32_1 = arith.constant 0 : i32
    return %c0_i32, %c0_i32_0 : i32, i32
  }
  func.func @transform_3(%arg0: i32) -> (i32, i32) {
    %c0_i32 = arith.constant 0 : i32
    %c0_i32_0 = arith.constant 0 : i32
    %c0_i32_1 = arith.constant 0 : i32
    return %c0_i32, %c0_i32_0 : i32, i32
  }
  func.func @transform_4(%arg0: i32) -> (i32, i32) {
    %c0_i32 = arith.constant 0 : i32
    %c0_i32_0 = arith.constant 0 : i32
    %c0_i32_1 = arith.constant 0 : i32
    return %c0_i32, %c0_i32_0 : i32, i32
  }
  func.func @transform_5(%arg0: i32) -> (i32, i32) {
    %c0_i32 = arith.constant 0 : i32
    %c0_i32_0 = arith.constant 0 : i32
    return %arg0, %c0_i32 : i32, i32
  }
}

</mosaic_0001>

<llo_original>
// kernel: mlp_forward.1
$region0: #{mlp_forward.1}
  #allocation0 [shape = 'u32[]', space=smem, size = 0x4, offset = 0x4, fixed_abs, tag = 'smem constant byte address 0x4 - core index']
  #allocation1 [shape = 'u32[144,128]{1,0:T(1,128)}', space=vmem, size = 0x12000, scoped, tag = 'internal scratch']
  %s0 = inlined_call_operand.hbm [shape: f32[256,128], index: 0, kind: input, shape index: {}]
  %s1 = inlined_call_operand.hbm [shape: f32[128,512], index: 1, kind: input, shape index: {}]
  %s2 = inlined_call_operand.vmem [shape: f32[1,512], index: 2, kind: input, shape index: {}]
  %s3 = inlined_call_operand.hbm [shape: f32[512,128], index: 3, kind: input, shape index: {}]
  %s4 = inlined_call_operand.vmem [shape: f32[1,128], index: 4, kind: input, shape index: {}]
  %s5 = inlined_call_operand.hbm [shape: f32[256,128], index: 5, kind: output, shape index: {}]
  %s6 = sld [smem:[#allocation0]]
  $region42: #{mlp_forward.1} parent=0
    _
  %s8 = ssub.s32 1, %s6
  %s9 = scalar_select 0, %s8, %s6
  $region1: #{mlp_forward.1} parent=0
    #allocation2 [shape = 'u8[131072]{0}', space=vmem, size = 0x20000, scoped, tag = 'input window, operand 0, single buffered']
    #allocation3 [shape = 's32[1]{0}', space=sflag, size = 0x4, scoped, tag = 'scoped memory for mlp_forward.1']
    #allocation4 [shape = 's32[1]{0}', space=sflag, size = 0x4, scoped, tag = 'scoped memory for mlp_forward.1']
    #allocation5 [shape = 'u8[262144]{0}', space=vmem, size = 0x40000, scoped, tag = 'input window, operand 1, single buffered']
    #allocation6 [shape = 's32[1]{0}', space=sflag, size = 0x4, scoped, tag = 'scoped memory for mlp_forward.1']
    #allocation7 [shape = 'u8[262144]{0}', space=vmem, size = 0x40000, scoped, tag = 'input window, operand 3, single buffered']
    #allocation8 [shape = 'u8[131072]{0}', space=vmem, size = 0x20000, scoped, tag = 'output window, operand 0, single buffered']
    %10 = vsyncpa [#allocation3], 0
    %11 = vsyncpa [#allocation6], 0
    %12 = vsyncpa [#allocation4], 0
    // Predicated region
    $region2: #{mlp_forward.1} parent=1 // pred_check
      _
    $region3: #{mlp_forward.1} parent=1 // pred_check_branch
      %14 = sbr.rel (0) target = $region5
    $region4: #{mlp_forward.1} parent=1 // pred_region
      %s16 = ssub.s32 4096, 4096
      %17 = vsyncadd [#allocation3], %s16
      %s18 = sshll.u32 [#allocation2], 4
      %s19 = int_to_ptr.vmem [resolvable:$true] %s18
      %24 = dma.hbm_to_vmem [thread:$0]  %s0, 4096, %s19, [#allocation3], 128, 128, 8
    $region5: #{mlp_forward.1} parent=1 // pred_fallthru
      _
    // Predicated region
    $region6: #{mlp_forward.1} parent=1 // pred_check
      _
    $region7: #{mlp_forward.1} parent=1 // pred_check_branch
      %26 = sbr.rel (0) target = $region9
    $region8: #{mlp_forward.1} parent=1 // pred_region
      %s28 = ssub.s32 8192, 8192
      %29 = vsyncadd [#allocation6], %s28
      %s30 = sshll.u32 [#allocation5], 4
      %s31 = int_to_ptr.vmem [resolvable:$true] %s30
      %36 = dma.hbm_to_vmem [thread:$0]  %s1, 8192, %s31, [#allocation6], 512, 512, 32
    $region9: #{mlp_forward.1} parent=1 // pred_fallthru
      _
    // Predicated region
    $region10: #{mlp_forward.1} parent=1 // pred_check
      _
    $region11: #{mlp_forward.1} parent=1 // pred_check_branch
      %38 = sbr.rel (0) target = $region13
    $region12: #{mlp_forward.1} parent=1 // pred_region
      _
    $region13: #{mlp_forward.1} parent=1 // pred_fallthru
      _
    // Predicated region
    $region14: #{mlp_forward.1} parent=1 // pred_check
      _
    $region15: #{mlp_forward.1} parent=1 // pred_check_branch
      %40 = sbr.rel (0) target = $region17
    $region16: #{mlp_forward.1} parent=1 // pred_region
      %s42 = ssub.s32 8192, 8192
      %43 = vsyncadd [#allocation6], %s42
      %s44 = sshll.u32 [#allocation7], 4
      %s45 = int_to_ptr.vmem [resolvable:$true] %s44
      %50 = dma.hbm_to_vmem [thread:$0]  %s3, 8192, %s45, [#allocation6], 128, 128, 8
    $region17: #{mlp_forward.1} parent=1 // pred_fallthru
      _
    // Predicated region
    $region18: #{mlp_forward.1} parent=1 // pred_check
      _
    $region19: #{mlp_forward.1} parent=1 // pred_check_branch
      %52 = sbr.rel (0) target = $region21
    $region20: #{mlp_forward.1} parent=1 // pred_region
      _
    $region21: #{mlp_forward.1} parent=1 // pred_fallthru
      _
    // Predicated region
    $region22: #{mlp_forward.1} parent=1 // pred_check
      _
    $region23: #{mlp_forward.1} parent=1 // pred_check_branch
      %54 = sbr.rel (0) target = $region25
    $region24: #{mlp_forward.1} parent=1 // pred_region
      %55 = dma.done [#allocation3], 4096
    $region25: #{mlp_forward.1} parent=1 // pred_fallthru
      _
    // Predicated region
    $region26: #{mlp_forward.1} parent=1 // pred_check
      _
    $region27: #{mlp_forward.1} parent=1 // pred_check_branch
      %57 = sbr.rel (0) target = $region29
    $region28: #{mlp_forward.1} parent=1 // pred_region
      %58 = dma.done [#allocation6], 8192
    $region29: #{mlp_forward.1} parent=1 // pred_fallthru
      _
    // Predicated region
    $region30: #{mlp_forward.1} parent=1 // pred_check
      _
    $region31: #{mlp_forward.1} parent=1 // pred_check_branch
      %60 = sbr.rel (0) target = $region33
    $region32: #{mlp_forward.1} parent=1 // pred_region
      %61 = dma.done [#allocation6], 8192
    $region33: #{mlp_forward.1} parent=1 // pred_fallthru
      _
    %v62 = vld [vmem:[#allocation2] sm:$0xff]
    %v63 = vld [vmem:[#allocation2 + $0x8] sm:$0xff]
    %v64 = vld [vmem:[#allocation2 + $0x10] sm:$0xff]
    %v65 = vld [vmem:[#allocation2 + $0x18] sm:$0xff]
    %v66 = vld [vmem:[#allocation2 + $0x20] sm:$0xff]
    %v67 = vld [vmem:[#allocation2 + $0x28] sm:$0xff]
    %v68 = vld [vmem:[#allocation2 + $0x30] sm:$0xff]
    %v69 = vld [vmem:[#allocation2 + $0x38] sm:$0xff]
    %v70 = vld [vmem:[#allocation2 + $0x40] sm:$0xff]
    %v71 = vld [vmem:[#allocation2 + $0x48] sm:$0xff]
    %v72 = vld [vmem:[#allocation2 + $0x50] sm:$0xff]
    %v73 = vld [vmem:[#allocation2 + $0x58] sm:$0xff]
    %v74 = vld [vmem:[#allocation2 + $0x60] sm:$0xff]
    %v75 = vld [vmem:[#allocation2 + $0x68] sm:$0xff]
    %v76 = vld [vmem:[#allocation2 + $0x70] sm:$0xff]
    %v77 = vld [vmem:[#allocation2 + $0x78] sm:$0xff]
    %v78 = vld [vmem:[#allocation2 + $0x80] sm:$0xff]
    %v79 = vld [vmem:[#allocation2 + $0x88] sm:$0xff]
    %v80 = vld [vmem:[#allocation2 + $0x90] sm:$0xff]
    %v81 = vld [vmem:[#allocation2 + $0x98] sm:$0xff]
    %v82 = vld [vmem:[#allocation2 + $0xa0] sm:$0xff]
    %v83 = vld [vmem:[#allocation2 + $0xa8] sm:$0xff]
    %v84 = vld [vmem:[#allocation2 + $0xb0] sm:$0xff]
    %v85 = vld [vmem:[#allocation2 + $0xb8] sm:$0xff]
    %v86 = vld [vmem:[#allocation2 + $0xc0] sm:$0xff]
    %v87 = vld [vmem:[#allocation2 + $0xc8] sm:$0xff]
    %v88 = vld [vmem:[#allocation2 + $0xd0] sm:$0xff]
    %v89 = vld [vmem:[#allocation2 + $0xd8] sm:$0xff]
    %v90 = vld [vmem:[#allocation2 + $0xe0] sm:$0xff]
    %v91 = vld [vmem:[#allocation2 + $0xe8] sm:$0xff]
    %v92 = vld [vmem:[#allocation2 + $0xf0] sm:$0xff]
    %v93 = vld [vmem:[#allocation2 + $0xf8] sm:$0xff]
    %v94 = vld [vmem:[#allocation5] sm:$0xff]
    %v95 = vld [vmem:[#allocation5 + $0x8] sm:$0xff]
    %v96 = vld [vmem:[#allocation5 + $0x10] sm:$0xff]
    %v97 = vld [vmem:[#allocation5 + $0x18] sm:$0xff]
    %v98 = vld [vmem:[#allocation5 + $0x20] sm:$0xff]
    %v99 = vld [vmem:[#allocation5 + $0x28] sm:$0xff]
    %v100 = vld [vmem:[#allocation5 + $0x30] sm:$0xff]
    %v101 = vld [vmem:[#allocation5 + $0x38] sm:$0xff]
    %v102 = vld [vmem:[#allocation5 + $0x40] sm:$0xff]
    %v103 = vld [vmem:[#allocation5 + $0x48] sm:$0xff]
    %v104 = vld [vmem:[#allocation5 + $0x50] sm:$0xff]
    %v105 = vld [vmem:[#allocation5 + $0x58] sm:$0xff]
    %v106 = vld [vmem:[#allocation5 + $0x60] sm:$0xff]
    %v107 = vld [vmem:[#allocation5 + $0x68] sm:$0xff]
    %v108 = vld [vmem:[#allocation5 + $0x70] sm:$0xff]
    %v109 = vld [vmem:[#allocation5 + $0x78] sm:$0xff]
    %v110 = vld [vmem:[#allocation5 + $0x80] sm:$0xff]
    %v111 = vld [vmem:[#allocation5 + $0x88] sm:$0xff]
    %v112 = vld [vmem:[#allocation5 + $0x90] sm:$0xff]
    %v113 = vld [vmem:[#allocation5 + $0x98] sm:$0xff]
    %v114 = vld [vmem:[#allocation5 + $0xa0] sm:$0xff]
    %v115 = vld [vmem:[#allocation5 + $0xa8] sm:$0xff]
    %v116 = vld [vmem:[#allocation5 + $0xb0] sm:$0xff]
    %v117 = vld [vmem:[#allocation5 + $0xb8] sm:$0xff]
    %v118 = vld [vmem:[#allocation5 + $0xc0] sm:$0xff]
    %v119 = vld [vmem:[#allocation5 + $0xc8] sm:$0xff]
    %v120 = vld [vmem:[#allocation5 + $0xd0] sm:$0xff]
    %v121 = vld [vmem:[#allocation5 + $0xd8] sm:$0xff]
    %v122 = vld [vmem:[#allocation5 + $0xe0] sm:$0xff]
    %v123 = vld [vmem:[#allocation5 + $0xe8] sm:$0xff]
    %v124 = vld [vmem:[#allocation5 + $0xf0] sm:$0xff]
    %v125 = vld [vmem:[#allocation5 + $0xf8] sm:$0xff]
    %v126 = vld [vmem:[#allocation5 + $0x100] sm:$0xff]
    %v127 = vld [vmem:[#allocation5 + $0x108] sm:$0xff]
    %v128 = vld [vmem:[#allocation5 + $0x110] sm:$0xff]
    %v129 = vld [vmem:[#allocation5 + $0x118] sm:$0xff]
    %v130 = vld [vmem:[#allocation5 + $0x120] sm:$0xff]
    %v131 = vld [vmem:[#allocation5 + $0x128] sm:$0xff]
    %v132 = vld [vmem:[#allocation5 + $0x130] sm:$0xff]
    %v133 = vld [vmem:[#allocation5 + $0x138] sm:$0xff]
    %v134 = vld [vmem:[#allocation5 + $0x140] sm:$0xff]
    %v135 = vld [vmem:[#allocation5 + $0x148] sm:$0xff]
    %v136 = vld [vmem:[#allocation5 + $0x150] sm:$0xff]
    %v137 = vld [vmem:[#allocation5 + $0x158] sm:$0xff]
    %v138 = vld [vmem:[#allocation5 + $0x160] sm:$0xff]
    %v139 = vld [vmem:[#allocation5 + $0x168] sm:$0xff]
    %v140 = vld [vmem:[#allocation5 + $0x170] sm:$0xff]
    %v141 = vld [vmem:[#allocation5 + $0x178] sm:$0xff]
    %v142 = vld [vmem:[#allocation5 + $0x180] sm:$0xff]
    %v143 = vld [vmem:[#allocation5 + $0x188] sm:$0xff]
    %v144 = vld [vmem:[#allocation5 + $0x190] sm:$0xff]
    %v145 = vld [vmem:[#allocation5 + $0x198] sm:$0xff]
    %v146 = vld [vmem:[#allocation5 + $0x1a0] sm:$0xff]
    %v147 = vld [vmem:[#allocation5 + $0x1a8] sm:$0xff]
    %v148 = vld [vmem:[#allocation5 + $0x1b0] sm:$0xff]
    %v149 = vld [vmem:[#allocation5 + $0x1b8] sm:$0xff]
    %v150 = vld [vmem:[#allocation5 + $0x1c0] sm:$0xff]
    %v151 = vld [vmem:[#allocation5 + $0x1c8] sm:$0xff]
    %v152 = vld [vmem:[#allocation5 + $0x1d0] sm:$0xff]
    %v153 = vld [vmem:[#allocation5 + $0x1d8] sm:$0xff]
    %v154 = vld [vmem:[#allocation5 + $0x1e0] sm:$0xff]
    %v155 = vld [vmem:[#allocation5 + $0x1e8] sm:$0xff]
    %v156 = vld [vmem:[#allocation5 + $0x1f0] sm:$0xff]
    %v157 = vld [vmem:[#allocation5 + $0x1f8] sm:$0xff]
    %v158 = vld [vmem:[%s2] sm:$0xf]
    %v160 = vlaneseq
    %v161 = vshrl.u32 %v160, 7
    %v162 = vsub.s32 0, %v161
    %v163 = vrot.slane %v158, %v162
    %v164 = vlaneseq
    %v165 = vshrl.u32 %v164, 7
    %v166 = vsub.s32 1, %v165
    %v167 = vrot.slane %v158, %v166
    %v168 = vlaneseq
    %v169 = vshrl.u32 %v168, 7
    %v170 = vsub.s32 2, %v169
    %v171 = vrot.slane %v158, %v170
    %v172 = vlaneseq
    %v173 = vshrl.u32 %v172, 7
    %v174 = vsub.s32 3, %v173
    %v175 = vrot.slane %v158, %v174
    %180 = vmatprep.subr.mxu0 %v155
    %181 = vmatpush1.msra.mxu0 %v154
    %182 = vmatprep.subr.mxu0 %v151
    %183 = vmatpush1.msra.mxu0 %v150
    %184 = vmatprep.subr.mxu0 %v147
    %185 = vmatpush1.msra.mxu0 %v146
    %186 = vmatprep.subr.mxu0 %v143
    %187 = vmatpush1.msra.mxu0 %v142
    %188 = vmatprep.subr.mxu0 %v139
    %189 = vmatpush1.msra.mxu0 %v138
    %190 = vmatprep.subr.mxu0 %v135
    %191 = vmatpush1.msra.mxu0 %v134
    %192 = vmatprep.subr.mxu0 %v131
    %193 = vmatpush1.msra.mxu0 %v130
    %194 = vmatprep.subr.mxu0 %v127
    %195 = vmatpush1.msra.mxu0 %v126
    %196 = vmatprep.subr.mxu0 %v123
    %197 = vmatpush1.msra.mxu0 %v122
    %198 = vmatprep.subr.mxu0 %v119
    %199 = vmatpush1.msra.mxu0 %v118
    %200 = vmatprep.subr.mxu0 %v115
    %201 = vmatpush1.msra.mxu0 %v114
    %202 = vmatprep.subr.mxu0 %v111
    %203 = vmatpush1.msra.mxu0 %v110
    %204 = vmatprep.subr.mxu0 %v107
    %205 = vmatpush1.msra.mxu0 %v106
    %206 = vmatprep.subr.mxu0 %v103
    %207 = vmatpush1.msra.mxu0 %v102
    %208 = vmatprep.subr.mxu0 %v99
    %209 = vmatpush1.msra.mxu0 %v98
    %210 = vmatprep.subr.mxu0 %v95
    %211 = vmatpush1.msra.mxu0 %v94
    %212 = vmatprep.subr.mxu0 0.0
    %213 = vmatpush2.msra.mxu0 0.0
    %214 = vmatprep.subr.mxu0 0.0
    %215 = vmatpush2.msra.mxu0 0.0
    %216 = vmatprep.subr.mxu0 0.0
    %217 = vmatpush2.msra.mxu0 0.0
    %218 = vmatprep.subr.mxu0 0.0
    %219 = vmatpush2.msra.mxu0 0.0
    %220 = vmatprep.subr.mxu0 0.0
    %221 = vmatpush2.msra.mxu0 0.0
    %222 = vmatprep.subr.mxu0 0.0
    %223 = vmatpush2.msra.mxu0 0.0
    %224 = vmatprep.subr.mxu0 0.0
    %225 = vmatpush2.msra.mxu0 0.0
    %226 = vmatprep.subr.mxu0 0.0
    %227 = vmatpush2.msra.mxu0 0.0
    %228 = vmatprep.subr.mxu0 0.0
    %229 = vmatpush2.msra.mxu0 0.0
    %230 = vmatprep.subr.mxu0 0.0
    %231 = vmatpush2.msra.mxu0 0.0
    %232 = vmatprep.subr.mxu0 0.0
    %233 = vmatpush2.msra.mxu0 0.0
    %234 = vmatprep.subr.mxu0 0.0
    %235 = vmatpush2.msra.mxu0 0.0
    %236 = vmatprep.subr.mxu0 0.0
    %237 = vmatpush2.msra.mxu0 0.0
    %238 = vmatprep.subr.mxu0 0.0
    %239 = vmatpush2.msra.mxu0 0.0
    %240 = vmatprep.subr.mxu0 0.0
    %241 = vmatpush2.msra.mxu0 0.0
    %242 = vmatprep.subr.mxu0 0.0
    %243 = vmatpush2.msra.mxu0 0.0
    %244 = vmatprep.mubr.f32.mxu0 0.0
    %245 = vmatmul.mubr.f32.gmra.mxu0 %v62
    %v246 = vpop.f32.mrf.mxu0
    %v247 = vadd.f32 %v163, %v246
    %v248 = vpop.f32.mrf.mxu0
    %v249 = vadd.f32 %v167, %v248
    %250 = vmatprep.mubr.f32.mxu0 0.0
    %251 = vmatmul.mubr.f32.gmra.mxu0 %v63
    %v252 = vpop.f32.mrf.mxu0
    %v253 = vadd.f32 %v163, %v252
    %v254 = vpop.f32.mrf.mxu0
    %v255 = vadd.f32 %v167, %v254
    %256 = vmatprep.mubr.f32.mxu0 0.0
    %257 = vmatmul.mubr.f32.gmra.mxu0 %v64
    %v258 = vpop.f32.mrf.mxu0
    %v259 = vadd.f32 %v163, %v258
    %v260 = vpop.f32.mrf.mxu0
    %v261 = vadd.f32 %v167, %v260
    %262 = vmatprep.mubr.f32.mxu0 0.0
    %263 = vmatmul.mubr.f32.gmra.mxu0 %v65
    %v264 = vpop.f32.mrf.mxu0
    %v265 = vadd.f32 %v163, %v264
    %v266 = vpop.f32.mrf.mxu0
    %v267 = vadd.f32 %v167, %v266
    %268 = vmatprep.mubr.f32.mxu0 0.0
    %269 = vmatmul.mubr.f32.gmra.mxu0 %v66
    %v270 = vpop.f32.mrf.mxu0
    %v271 = vadd.f32 %v163, %v270
    %v272 = vpop.f32.mrf.mxu0
    %v273 = vadd.f32 %v167, %v272
    %274 = vmatprep.mubr.f32.mxu0 0.0
    %275 = vmatmul.mubr.f32.gmra.mxu0 %v67
    %v276 = vpop.f32.mrf.mxu0
    %v277 = vadd.f32 %v163, %v276
    %v278 = vpop.f32.mrf.mxu0
    %v279 = vadd.f32 %v167, %v278
    %280 = vmatprep.mubr.f32.mxu0 0.0
    %281 = vmatmul.mubr.f32.gmra.mxu0 %v68
    %v282 = vpop.f32.mrf.mxu0
    %v283 = vadd.f32 %v163, %v282
    %v284 = vpop.f32.mrf.mxu0
    %v285 = vadd.f32 %v167, %v284
    %286 = vmatprep.mubr.f32.mxu0 0.0
    %287 = vmatmul.mubr.f32.gmra.mxu0 %v69
    %v288 = vpop.f32.mrf.mxu0
    %v289 = vadd.f32 %v163, %v288
    %v290 = vpop.f32.mrf.mxu0
    %v291 = vadd.f32 %v167, %v290
    %292 = vmatprep.mubr.f32.mxu0 0.0
    %293 = vmatmul.mubr.f32.gmra.mxu0 %v70
    %v294 = vpop.f32.mrf.mxu0
    %v295 = vadd.f32 %v163, %v294
    %v296 = vpop.f32.mrf.mxu0
    %v297 = vadd.f32 %v167, %v296
    %298 = vmatprep.mubr.f32.mxu0 0.0
    %299 = vmatmul.mubr.f32.gmra.mxu0 %v71
    %v300 = vpop.f32.mrf.mxu0
    %v301 = vadd.f32 %v163, %v300
    %v302 = vpop.f32.mrf.mxu0
    %v303 = vadd.f32 %v167, %v302
    %304 = vmatprep.mubr.f32.mxu0 0.0
    %305 = vmatmul.mubr.f32.gmra.mxu0 %v72
    %v306 = vpop.f32.mrf.mxu0
    %v307 = vadd.f32 %v163, %v306
    %v308 = vpop.f32.mrf.mxu0
    %v309 = vadd.f32 %v167, %v308
    %310 = vmatprep.mubr.f32.mxu0 0.0
    %311 = vmatmul.mubr.f32.gmra.mxu0 %v73
    %v312 = vpop.f32.mrf.mxu0
    %v313 = vadd.f32 %v163, %v312
    %v314 = vpop.f32.mrf.mxu0
    %v315 = vadd.f32 %v167, %v314
    %316 = vmatprep.mubr.f32.mxu0 0.0
    %317 = vmatmul.mubr.f32.gmra.mxu0 %v74
    %v318 = vpop.f32.mrf.mxu0
    %v319 = vadd.f32 %v163, %v318
    %v320 = vpop.f32.mrf.mxu0
    %v321 = vadd.f32 %v167, %v320
    %322 = vmatprep.mubr.f32.mxu0 0.0
    %323 = vmatmul.mubr.f32.gmra.mxu0 %v75
    %v324 = vpop.f32.mrf.mxu0
    %v325 = vadd.f32 %v163, %v324
    %v326 = vpop.f32.mrf.mxu0
    %v327 = vadd.f32 %v167, %v326
    %328 = vmatprep.mubr.f32.mxu0 0.0
    %329 = vmatmul.mubr.f32.gmra.mxu0 %v76
    %v330 = vpop.f32.mrf.mxu0
    %v331 = vadd.f32 %v163, %v330
    %v332 = vpop.f32.mrf.mxu0
    %v333 = vadd.f32 %v167, %v332
    %334 = vmatprep.mubr.f32.mxu0 0.0
    %335 = vmatmul.mubr.f32.gmra.mxu0 %v77
    %v336 = vpop.f32.mrf.mxu0
    %v337 = vadd.f32 %v163, %v336
    %v338 = vpop.f32.mrf.mxu0
    %v339 = vadd.f32 %v167, %v338
    %340 = vmatprep.mubr.f32.mxu0 0.0
    %341 = vmatmul.mubr.f32.gmra.mxu0 %v78
    %v342 = vpop.f32.mrf.mxu0
    %v343 = vadd.f32 %v163, %v342
    %v344 = vpop.f32.mrf.mxu0
    %v345 = vadd.f32 %v167, %v344
    %346 = vmatprep.mubr.f32.mxu0 0.0
    %347 = vmatmul.mubr.f32.gmra.mxu0 %v79
    %v348 = vpop.f32.mrf.mxu0
    %v349 = vadd.f32 %v163, %v348
    %v350 = vpop.f32.mrf.mxu0
    %v351 = vadd.f32 %v167, %v350
    %352 = vmatprep.mubr.f32.mxu0 0.0
    %353 = vmatmul.mubr.f32.gmra.mxu0 %v80
    %v354 = vpop.f32.mrf.mxu0
    %v355 = vadd.f32 %v163, %v354
    %v356 = vpop.f32.mrf.mxu0
    %v357 = vadd.f32 %v167, %v356
    %358 = vmatprep.mubr.f32.mxu0 0.0
    %359 = vmatmul.mubr.f32.gmra.mxu0 %v81
    %v360 = vpop.f32.mrf.mxu0
    %v361 = vadd.f32 %v163, %v360
    %v362 = vpop.f32.mrf.mxu0
    %v363 = vadd.f32 %v167, %v362
    %364 = vmatprep.mubr.f32.mxu0 0.0
    %365 = vmatmul.mubr.f32.gmra.mxu0 %v82
    %v366 = vpop.f32.mrf.mxu0
    %v367 = vadd.f32 %v163, %v366
    %v368 = vpop.f32.mrf.mxu0
    %v369 = vadd.f32 %v167, %v368
    %370 = vmatprep.mubr.f32.mxu0 0.0
    %371 = vmatmul.mubr.f32.gmra.mxu0 %v83
    %v372 = vpop.f32.mrf.mxu0
    %v373 = vadd.f32 %v163, %v372
    %v374 = vpop.f32.mrf.mxu0
    %v375 = vadd.f32 %v167, %v374
    %376 = vmatprep.mubr.f32.mxu0 0.0
    %377 = vmatmul.mubr.f32.gmra.mxu0 %v84
    %v378 = vpop.f32.mrf.mxu0
    %v379 = vadd.f32 %v163, %v378
    %v380 = vpop.f32.mrf.mxu0
    %v381 = vadd.f32 %v167, %v380
    %382 = vmatprep.mubr.f32.mxu0 0.0
    %383 = vmatmul.mubr.f32.gmra.mxu0 %v85
    %v384 = vpop.f32.mrf.mxu0
    %v385 = vadd.f32 %v163, %v384
    %v386 = vpop.f32.mrf.mxu0
    %v387 = vadd.f32 %v167, %v386
    %388 = vmatprep.mubr.f32.mxu0 0.0
    %389 = vmatmul.mubr.f32.gmra.mxu0 %v86
    %v390 = vpop.f32.mrf.mxu0
    %v391 = vadd.f32 %v163, %v390
    %v392 = vpop.f32.mrf.mxu0
    %v393 = vadd.f32 %v167, %v392
    %394 = vmatprep.mubr.f32.mxu0 0.0
    %395 = vmatmul.mubr.f32.gmra.mxu0 %v87
    %v396 = vpop.f32.mrf.mxu0
    %v397 = vadd.f32 %v163, %v396
    %v398 = vpop.f32.mrf.mxu0
    %v399 = vadd.f32 %v167, %v398
    %400 = vmatprep.mubr.f32.mxu0 0.0
    %401 = vmatmul.mubr.f32.gmra.mxu0 %v88
    %v402 = vpop.f32.mrf.mxu0
    %v403 = vadd.f32 %v163, %v402
    %v404 = vpop.f32.mrf.mxu0
    %v405 = vadd.f32 %v167, %v404
    %406 = vmatprep.mubr.f32.mxu0 0.0
    %407 = vmatmul.mubr.f32.gmra.mxu0 %v89
    %v408 = vpop.f32.mrf.mxu0
    %v409 = vadd.f32 %v163, %v408
    %v410 = vpop.f32.mrf.mxu0
    %v411 = vadd.f32 %v167, %v410
    %412 = vmatprep.mubr.f32.mxu0 0.0
    %413 = vmatmul.mubr.f32.gmra.mxu0 %v90
    %v414 = vpop.f32.mrf.mxu0
    %v415 = vadd.f32 %v163, %v414
    %v416 = vpop.f32.mrf.mxu0
    %v417 = vadd.f32 %v167, %v416
    %418 = vmatprep.mubr.f32.mxu0 0.0
    %419 = vmatmul.mubr.f32.gmra.mxu0 %v91
    %v420 = vpop.f32.mrf.mxu0
    %v421 = vadd.f32 %v163, %v420
    %v422 = vpop.f32.mrf.mxu0
    %v423 = vadd.f32 %v167, %v422
    %424 = vmatprep.mubr.f32.mxu0 0.0
    %425 = vmatmul.mubr.f32.gmra.mxu0 %v92
    %v426 = vpop.f32.mrf.mxu0
    %v427 = vadd.f32 %v163, %v426
    %v428 = vpop.f32.mrf.mxu0
    %v429 = vadd.f32 %v167, %v428
    %430 = vmatprep.mubr.f32.mxu0 0.0
    %431 = vmatmul.mubr.f32.gmra.mxu0 %v93
    %v432 = vpop.f32.mrf.mxu0
    %v433 = vadd.f32 %v163, %v432
    %v434 = vpop.f32.mrf.mxu0
    %v435 = vadd.f32 %v167, %v434
    %436 = vdwg.mxu0
    %437 = vmatprep.subr.mxu0 %v157
    %438 = vmatpush1.msra.mxu0 %v156
    %439 = vmatprep.subr.mxu0 %v153
    %440 = vmatpush1.msra.mxu0 %v152
    %441 = vmatprep.subr.mxu0 %v149
    %442 = vmatpush1.msra.mxu0 %v148
    %443 = vmatprep.subr.mxu0 %v145
    %444 = vmatpush1.msra.mxu0 %v144
    %445 = vmatprep.subr.mxu0 %v141
    %446 = vmatpush1.msra.mxu0 %v140
    %447 = vmatprep.subr.mxu0 %v137
    %448 = vmatpush1.msra.mxu0 %v136
    %449 = vmatprep.subr.mxu0 %v133
    %450 = vmatpush1.msra.mxu0 %v132
    %451 = vmatprep.subr.mxu0 %v129
    %452 = vmatpush1.msra.mxu0 %v128
    %453 = vmatprep.subr.mxu0 %v125
    %454 = vmatpush1.msra.mxu0 %v124
    %455 = vmatprep.subr.mxu0 %v121
    %456 = vmatpush1.msra.mxu0 %v120
    %457 = vmatprep.subr.mxu0 %v117
    %458 = vmatpush1.msra.mxu0 %v116
    %459 = vmatprep.subr.mxu0 %v113
    %460 = vmatpush1.msra.mxu0 %v112
    %461 = vmatprep.subr.mxu0 %v109
    %462 = vmatpush1.msra.mxu0 %v108
    %463 = vmatprep.subr.mxu0 %v105
    %464 = vmatpush1.msra.mxu0 %v104
    %465 = vmatprep.subr.mxu0 %v101
    %466 = vmatpush1.msra.mxu0 %v100
    %467 = vmatprep.subr.mxu0 %v97
    %468 = vmatpush1.msra.mxu0 %v96
    %469 = vmatprep.subr.mxu0 0.0
    %470 = vmatpush2.msra.mxu0 0.0
    %471 = vmatprep.subr.mxu0 0.0
    %472 = vmatpush2.msra.mxu0 0.0
    %473 = vmatprep.subr.mxu0 0.0
    %474 = vmatpush2.msra.mxu0 0.0
    %475 = vmatprep.subr.mxu0 0.0
    %476 = vmatpush2.msra.mxu0 0.0
    %477 = vmatprep.subr.mxu0 0.0
    %478 = vmatpush2.msra.mxu0 0.0
    %479 = vmatprep.subr.mxu0 0.0
    %480 = vmatpush2.msra.mxu0 0.0
    %481 = vmatprep.subr.mxu0 0.0
    %482 = vmatpush2.msra.mxu0 0.0
    %483 = vmatprep.subr.mxu0 0.0
    %484 = vmatpush2.msra.mxu0 0.0
    %485 = vmatprep.subr.mxu0 0.0
    %486 = vmatpush2.msra.mxu0 0.0
    %487 = vmatprep.subr.mxu0 0.0
    %488 = vmatpush2.msra.mxu0 0.0
    %489 = vmatprep.subr.mxu0 0.0
    %490 = vmatpush2.msra.mxu0 0.0
    %491 = vmatprep.subr.mxu0 0.0
    %492 = vmatpush2.msra.mxu0 0.0
    %493 = vmatprep.subr.mxu0 0.0
    %494 = vmatpush2.msra.mxu0 0.0
    %495 = vmatprep.subr.mxu0 0.0
    %496 = vmatpush2.msra.mxu0 0.0
    %497 = vmatprep.subr.mxu0 0.0
    %498 = vmatpush2.msra.mxu0 0.0
    %499 = vmatprep.subr.mxu0 0.0
    %500 = vmatpush2.msra.mxu0 0.0
    %501 = vmatprep.mubr.f32.mxu0 0.0
    %502 = vmatmul.mubr.f32.gmra.mxu0 %v62
    %v503 = vpop.f32.mrf.mxu0
    %v504 = vadd.f32 %v171, %v503
    %v505 = vpop.f32.mrf.mxu0
    %v506 = vadd.f32 %v175, %v505
    %507 = vmatprep.mubr.f32.mxu0 0.0
    %508 = vmatmul.mubr.f32.gmra.mxu0 %v63
    %v509 = vpop.f32.mrf.mxu0
    %v510 = vadd.f32 %v171, %v509
    %v511 = vpop.f32.mrf.mxu0
    %v512 = vadd.f32 %v175, %v511
    %513 = vmatprep.mubr.f32.mxu0 0.0
    %514 = vmatmul.mubr.f32.gmra.mxu0 %v64
    %v515 = vpop.f32.mrf.mxu0
    %v516 = vadd.f32 %v171, %v515
    %v517 = vpop.f32.mrf.mxu0
    %v518 = vadd.f32 %v175, %v517
    %519 = vmatprep.mubr.f32.mxu0 0.0
    %520 = vmatmul.mubr.f32.gmra.mxu0 %v65
    %v521 = vpop.f32.mrf.mxu0
    %v522 = vadd.f32 %v171, %v521
    %v523 = vpop.f32.mrf.mxu0
    %v524 = vadd.f32 %v175, %v523
    %525 = vmatprep.mubr.f32.mxu0 0.0
    %526 = vmatmul.mubr.f32.gmra.mxu0 %v66
    %v527 = vpop.f32.mrf.mxu0
    %v528 = vadd.f32 %v171, %v527
    %v529 = vpop.f32.mrf.mxu0
    %v530 = vadd.f32 %v175, %v529
    %531 = vmatprep.mubr.f32.mxu0 0.0
    %532 = vmatmul.mubr.f32.gmra.mxu0 %v67
    %v533 = vpop.f32.mrf.mxu0
    %v534 = vadd.f32 %v171, %v533
    %v535 = vpop.f32.mrf.mxu0
    %v536 = vadd.f32 %v175, %v535
    %537 = vmatprep.mubr.f32.mxu0 0.0
    %538 = vmatmul.mubr.f32.gmra.mxu0 %v68
    %v539 = vpop.f32.mrf.mxu0
    %v540 = vadd.f32 %v171, %v539
    %v541 = vpop.f32.mrf.mxu0
    %v542 = vadd.f32 %v175, %v541
    %543 = vmatprep.mubr.f32.mxu0 0.0
    %544 = vmatmul.mubr.f32.gmra.mxu0 %v69
    %v545 = vpop.f32.mrf.mxu0
    %v546 = vadd.f32 %v171, %v545
    %v547 = vpop.f32.mrf.mxu0
    %v548 = vadd.f32 %v175, %v547
    %549 = vmatprep.mubr.f32.mxu0 0.0
    %550 = vmatmul.mubr.f32.gmra.mxu0 %v70
    %v551 = vpop.f32.mrf.mxu0
    %v552 = vadd.f32 %v171, %v551
    %v553 = vpop.f32.mrf.mxu0
    %v554 = vadd.f32 %v175, %v553
    %555 = vmatprep.mubr.f32.mxu0 0.0
    %556 = vmatmul.mubr.f32.gmra.mxu0 %v71
    %v557 = vpop.f32.mrf.mxu0
    %v558 = vadd.f32 %v171, %v557
    %v559 = vpop.f32.mrf.mxu0
    %v560 = vadd.f32 %v175, %v559
    %561 = vmatprep.mubr.f32.mxu0 0.0
    %562 = vmatmul.mubr.f32.gmra.mxu0 %v72
    %v563 = vpop.f32.mrf.mxu0
    %v564 = vadd.f32 %v171, %v563
    %v565 = vpop.f32.mrf.mxu0
    %v566 = vadd.f32 %v175, %v565
    %567 = vmatprep.mubr.f32.mxu0 0.0
    %568 = vmatmul.mubr.f32.gmra.mxu0 %v73
    %v569 = vpop.f32.mrf.mxu0
    %v570 = vadd.f32 %v171, %v569
    %v571 = vpop.f32.mrf.mxu0
    %v572 = vadd.f32 %v175, %v571
    %573 = vmatprep.mubr.f32.mxu0 0.0
    %574 = vmatmul.mubr.f32.gmra.mxu0 %v74
    %v575 = vpop.f32.mrf.mxu0
    %v576 = vadd.f32 %v171, %v575
    %v577 = vpop.f32.mrf.mxu0
    %v578 = vadd.f32 %v175, %v577
    %579 = vmatprep.mubr.f32.mxu0 0.0
    %580 = vmatmul.mubr.f32.gmra.mxu0 %v75
    %v581 = vpop.f32.mrf.mxu0
    %v582 = vadd.f32 %v171, %v581
    %v583 = vpop.f32.mrf.mxu0
    %v584 = vadd.f32 %v175, %v583
    %585 = vmatprep.mubr.f32.mxu0 0.0
    %586 = vmatmul.mubr.f32.gmra.mxu0 %v76
    %v587 = vpop.f32.mrf.mxu0
    %v588 = vadd.f32 %v171, %v587
    %v589 = vpop.f32.mrf.mxu0
    %v590 = vadd.f32 %v175, %v589
    %591 = vmatprep.mubr.f32.mxu0 0.0
    %592 = vmatmul.mubr.f32.gmra.mxu0 %v77
    %v593 = vpop.f32.mrf.mxu0
    %v594 = vadd.f32 %v171, %v593
    %v595 = vpop.f32.mrf.mxu0
    %v596 = vadd.f32 %v175, %v595
    %597 = vmatprep.mubr.f32.mxu0 0.0
    %598 = vmatmul.mubr.f32.gmra.mxu0 %v78
    %v599 = vpop.f32.mrf.mxu0
    %v600 = vadd.f32 %v171, %v599
    %v601 = vpop.f32.mrf.mxu0
    %v602 = vadd.f32 %v175, %v601
    %603 = vmatprep.mubr.f32.mxu0 0.0
    %604 = vmatmul.mubr.f32.gmra.mxu0 %v79
    %v605 = vpop.f32.mrf.mxu0
    %v606 = vadd.f32 %v171, %v605
    %v607 = vpop.f32.mrf.mxu0
    %v608 = vadd.f32 %v175, %v607
    %609 = vmatprep.mubr.f32.mxu0 0.0
    %610 = vmatmul.mubr.f32.gmra.mxu0 %v80
    %v611 = vpop.f32.mrf.mxu0
    %v612 = vadd.f32 %v171, %v611
    %v613 = vpop.f32.mrf.mxu0
    %v614 = vadd.f32 %v175, %v613
    %615 = vmatprep.mubr.f32.mxu0 0.0
    %616 = vmatmul.mubr.f32.gmra.mxu0 %v81
    %v617 = vpop.f32.mrf.mxu0
    %v618 = vadd.f32 %v171, %v617
    %v619 = vpop.f32.mrf.mxu0
    %v620 = vadd.f32 %v175, %v619
    %621 = vmatprep.mubr.f32.mxu0 0.0
    %622 = vmatmul.mubr.f32.gmra.mxu0 %v82
    %v623 = vpop.f32.mrf.mxu0
    %v624 = vadd.f32 %v171, %v623
    %v625 = vpop.f32.mrf.mxu0
    %v626 = vadd.f32 %v175, %v625
    %627 = vmatprep.mubr.f32.mxu0 0.0
    %628 = vmatmul.mubr.f32.gmra.mxu0 %v83
    %v629 = vpop.f32.mrf.mxu0
    %v630 = vadd.f32 %v171, %v629
    %v631 = vpop.f32.mrf.mxu0
    %v632 = vadd.f32 %v175, %v631
    %633 = vmatprep.mubr.f32.mxu0 0.0
    %634 = vmatmul.mubr.f32.gmra.mxu0 %v84
    %v635 = vpop.f32.mrf.mxu0
    %v636 = vadd.f32 %v171, %v635
    %v637 = vpop.f32.mrf.mxu0
    %v638 = vadd.f32 %v175, %v637
    %639 = vmatprep.mubr.f32.mxu0 0.0
    %640 = vmatmul.mubr.f32.gmra.mxu0 %v85
    %v641 = vpop.f32.mrf.mxu0
    %v642 = vadd.f32 %v171, %v641
    %v643 = vpop.f32.mrf.mxu0
    %v644 = vadd.f32 %v175, %v643
    %645 = vmatprep.mubr.f32.mxu0 0.0
    %646 = vmatmul.mubr.f32.gmra.mxu0 %v86
    %v647 = vpop.f32.mrf.mxu0
    %v648 = vadd.f32 %v171, %v647
    %v649 = vpop.f32.mrf.mxu0
    %v650 = vadd.f32 %v175, %v649
    %651 = vmatprep.mubr.f32.mxu0 0.0
    %652 = vmatmul.mubr.f32.gmra.mxu0 %v87
    %v653 = vpop.f32.mrf.mxu0
    %v654 = vadd.f32 %v171, %v653
    %v655 = vpop.f32.mrf.mxu0
    %v656 = vadd.f32 %v175, %v655
    %657 = vmatprep.mubr.f32.mxu0 0.0
    %658 = vmatmul.mubr.f32.gmra.mxu0 %v88
    %v659 = vpop.f32.mrf.mxu0
    %v660 = vadd.f32 %v171, %v659
    %v661 = vpop.f32.mrf.mxu0
    %v662 = vadd.f32 %v175, %v661
    %663 = vmatprep.mubr.f32.mxu0 0.0
    %664 = vmatmul.mubr.f32.gmra.mxu0 %v89
    %v665 = vpop.f32.mrf.mxu0
    %v666 = vadd.f32 %v171, %v665
    %v667 = vpop.f32.mrf.mxu0
    %v668 = vadd.f32 %v175, %v667
    %669 = vmatprep.mubr.f32.mxu0 0.0
    %670 = vmatmul.mubr.f32.gmra.mxu0 %v90
    %v671 = vpop.f32.mrf.mxu0
    %v672 = vadd.f32 %v171, %v671
    %v673 = vpop.f32.mrf.mxu0
    %v674 = vadd.f32 %v175, %v673
    %675 = vmatprep.mubr.f32.mxu0 0.0
    %676 = vmatmul.mubr.f32.gmra.mxu0 %v91
    %v677 = vpop.f32.mrf.mxu0
    %v678 = vadd.f32 %v171, %v677
    %v679 = vpop.f32.mrf.mxu0
    %v680 = vadd.f32 %v175, %v679
    %681 = vmatprep.mubr.f32.mxu0 0.0
    %682 = vmatmul.mubr.f32.gmra.mxu0 %v92
    %v683 = vpop.f32.mrf.mxu0
    %v684 = vadd.f32 %v171, %v683
    %v685 = vpop.f32.mrf.mxu0
    %v686 = vadd.f32 %v175, %v685
    %687 = vmatprep.mubr.f32.mxu0 0.0
    %688 = vmatmul.mubr.f32.gmra.mxu0 %v93
    %v689 = vpop.f32.mrf.mxu0
    %v690 = vadd.f32 %v171, %v689
    %v691 = vpop.f32.mrf.mxu0
    %v692 = vadd.f32 %v175, %v691
    %693 = vdwg.mxu0
    %v694 = vmul.f32 %v247, 0.5
    %v695 = vmul.f32 %v249, 0.5
    %v696 = vmul.f32 %v504, 0.5
    %v697 = vmul.f32 %v506, 0.5
    %v698 = vmul.f32 %v253, 0.5
    %v699 = vmul.f32 %v255, 0.5
    %v700 = vmul.f32 %v510, 0.5
    %v701 = vmul.f32 %v512, 0.5
    %v702 = vmul.f32 %v259, 0.5
    %v703 = vmul.f32 %v261, 0.5
    %v704 = vmul.f32 %v516, 0.5
    %v705 = vmul.f32 %v518, 0.5
    %v706 = vmul.f32 %v265, 0.5
    %v707 = vmul.f32 %v267, 0.5
    %v708 = vmul.f32 %v522, 0.5
    %v709 = vmul.f32 %v524, 0.5
    %v710 = vmul.f32 %v271, 0.5
    %v711 = vmul.f32 %v273, 0.5
    %v712 = vmul.f32 %v528, 0.5
    %v713 = vmul.f32 %v530, 0.5
    %v714 = vmul.f32 %v277, 0.5
    %v715 = vmul.f32 %v279, 0.5
    %v716 = vmul.f32 %v534, 0.5
    %v717 = vmul.f32 %v536, 0.5
    %v718 = vmul.f32 %v283, 0.5
    %v719 = vmul.f32 %v285, 0.5
    %v720 = vmul.f32 %v540, 0.5
    %v721 = vmul.f32 %v542, 0.5
    %v722 = vmul.f32 %v289, 0.5
    %v723 = vmul.f32 %v291, 0.5
    %v724 = vmul.f32 %v546, 0.5
    %v725 = vmul.f32 %v548, 0.5
    %v726 = vmul.f32 %v295, 0.5
    %v727 = vmul.f32 %v297, 0.5
    %v728 = vmul.f32 %v552, 0.5
    %v729 = vmul.f32 %v554, 0.5
    %v730 = vmul.f32 %v301, 0.5
    %v731 = vmul.f32 %v303, 0.5
    %v732 = vmul.f32 %v558, 0.5
    %v733 = vmul.f32 %v560, 0.5
    %v734 = vmul.f32 %v307, 0.5
    %v735 = vmul.f32 %v309, 0.5
    %v736 = vmul.f32 %v564, 0.5
    %v737 = vmul.f32 %v566, 0.5
    %v738 = vmul.f32 %v313, 0.5
    %v739 = vmul.f32 %v315, 0.5
    %v740 = vmul.f32 %v570, 0.5
    %v741 = vmul.f32 %v572, 0.5
    %v742 = vmul.f32 %v319, 0.5
    %v743 = vmul.f32 %v321, 0.5
    %v744 = vmul.f32 %v576, 0.5
    %v745 = vmul.f32 %v578, 0.5
    %v746 = vmul.f32 %v325, 0.5
    %v747 = vmul.f32 %v327, 0.5
    %v748 = vmul.f32 %v582, 0.5
    %v749 = vmul.f32 %v584, 0.5
    %v750 = vmul.f32 %v331, 0.5
    %v751 = vmul.f32 %v333, 0.5
    %v752 = vmul.f32 %v588, 0.5
    %v753 = vmul.f32 %v590, 0.5
    %v754 = vmul.f32 %v337, 0.5
    %v755 = vmul.f32 %v339, 0.5
    %v756 = vmul.f32 %v594, 0.5
    %v757 = vmul.f32 %v596, 0.5
    %v758 = vmul.f32 %v343, 0.5
    %v759 = vmul.f32 %v345, 0.5
    %v760 = vmul.f32 %v600, 0.5
    %v761 = vmul.f32 %v602, 0.5
    %v762 = vmul.f32 %v349, 0.5
    %v763 = vmul.f32 %v351, 0.5
    %v764 = vmul.f32 %v606, 0.5
    %v765 = vmul.f32 %v608, 0.5
    %v766 = vmul.f32 %v355, 0.5
    %v767 = vmul.f32 %v357, 0.5
    %v768 = vmul.f32 %v612, 0.5
    %v769 = vmul.f32 %v614, 0.5
    %v770 = vmul.f32 %v361, 0.5
    %v771 = vmul.f32 %v363, 0.5
    %v772 = vmul.f32 %v618, 0.5
    %v773 = vmul.f32 %v620, 0.5
    %v774 = vmul.f32 %v367, 0.5
    %v775 = vmul.f32 %v369, 0.5
    %v776 = vmul.f32 %v624, 0.5
    %v777 = vmul.f32 %v626, 0.5
    %v778 = vmul.f32 %v373, 0.5
    %v779 = vmul.f32 %v375, 0.5
    %v780 = vmul.f32 %v630, 0.5
    %v781 = vmul.f32 %v632, 0.5
    %v782 = vmul.f32 %v379, 0.5
    %v783 = vmul.f32 %v381, 0.5
    %v784 = vmul.f32 %v636, 0.5
    %v785 = vmul.f32 %v638, 0.5
    %v786 = vmul.f32 %v385, 0.5
    %v787 = vmul.f32 %v387, 0.5
    %v788 = vmul.f32 %v642, 0.5
    %v789 = vmul.f32 %v644, 0.5
    %v790 = vmul.f32 %v391, 0.5
    %v791 = vmul.f32 %v393, 0.5
    %v792 = vmul.f32 %v648, 0.5
    %v793 = vmul.f32 %v650, 0.5
    %v794 = vmul.f32 %v397, 0.5
    %v795 = vmul.f32 %v399, 0.5
    %v796 = vmul.f32 %v654, 0.5
    %v797 = vmul.f32 %v656, 0.5
    %v798 = vmul.f32 %v403, 0.5
    %v799 = vmul.f32 %v405, 0.5
    %v800 = vmul.f32 %v660, 0.5
    %v801 = vmul.f32 %v662, 0.5
    %v802 = vmul.f32 %v409, 0.5
    %v803 = vmul.f32 %v411, 0.5
    %v804 = vmul.f32 %v666, 0.5
    %v805 = vmul.f32 %v668, 0.5
    %v806 = vmul.f32 %v415, 0.5
    %v807 = vmul.f32 %v417, 0.5
    %v808 = vmul.f32 %v672, 0.5
    %v809 = vmul.f32 %v674, 0.5
    %v810 = vmul.f32 %v421, 0.5
    %v811 = vmul.f32 %v423, 0.5
    %v812 = vmul.f32 %v678, 0.5
    %v813 = vmul.f32 %v680, 0.5
    %v814 = vmul.f32 %v427, 0.5
    %v815 = vmul.f32 %v429, 0.5
    %v816 = vmul.f32 %v684, 0.5
    %v817 = vmul.f32 %v686, 0.5
    %v818 = vmul.f32 %v433, 0.5
    %v819 = vmul.f32 %v435, 0.5
    %v820 = vmul.f32 %v690, 0.5
    %v821 = vmul.f32 %v692, 0.5
    %v822 = vmul.f32 %v247, 0.70710677
    %v823 = vmul.f32 %v249, 0.70710677
    %v824 = vmul.f32 %v504, 0.70710677
    %v825 = vmul.f32 %v506, 0.70710677
    %v826 = vmul.f32 %v253, 0.70710677
    %v827 = vmul.f32 %v255, 0.70710677
    %v828 = vmul.f32 %v510, 0.70710677
    %v829 = vmul.f32 %v512, 0.70710677
    %v830 = vmul.f32 %v259, 0.70710677
    %v831 = vmul.f32 %v261, 0.70710677
    %v832 = vmul.f32 %v516, 0.70710677
    %v833 = vmul.f32 %v518, 0.70710677
    %v834 = vmul.f32 %v265, 0.70710677
    %v835 = vmul.f32 %v267, 0.70710677
    %v836 = vmul.f32 %v522, 0.70710677
    %v837 = vmul.f32 %v524, 0.70710677
    %v838 = vmul.f32 %v271, 0.70710677
    %v839 = vmul.f32 %v273, 0.70710677
    %v840 = vmul.f32 %v528, 0.70710677
    %v841 = vmul.f32 %v530, 0.70710677
    %v842 = vmul.f32 %v277, 0.70710677
    %v843 = vmul.f32 %v279, 0.70710677
    %v844 = vmul.f32 %v534, 0.70710677
    %v845 = vmul.f32 %v536, 0.70710677
    %v846 = vmul.f32 %v283, 0.70710677
    %v847 = vmul.f32 %v285, 0.70710677
    %v848 = vmul.f32 %v540, 0.70710677
    %v849 = vmul.f32 %v542, 0.70710677
    %v850 = vmul.f32 %v289, 0.70710677
    %v851 = vmul.f32 %v291, 0.70710677
    %v852 = vmul.f32 %v546, 0.70710677
    %v853 = vmul.f32 %v548, 0.70710677
    %v854 = vmul.f32 %v295, 0.70710677
    %v855 = vmul.f32 %v297, 0.70710677
    %v856 = vmul.f32 %v552, 0.70710677
    %v857 = vmul.f32 %v554, 0.70710677
    %v858 = vmul.f32 %v301, 0.70710677
    %v859 = vmul.f32 %v303, 0.70710677
    %v860 = vmul.f32 %v558, 0.70710677
    %v861 = vmul.f32 %v560, 0.70710677
    %v862 = vmul.f32 %v307, 0.70710677
    %v863 = vmul.f32 %v309, 0.70710677
    %v864 = vmul.f32 %v564, 0.70710677
    %v865 = vmul.f32 %v566, 0.70710677
    %v866 = vmul.f32 %v313, 0.70710677
    %v867 = vmul.f32 %v315, 0.70710677
    %v868 = vmul.f32 %v570, 0.70710677
    %v869 = vmul.f32 %v572, 0.70710677
    %v870 = vmul.f32 %v319, 0.70710677
    %v871 = vmul.f32 %v321, 0.70710677
    %v872 = vmul.f32 %v576, 0.70710677
    %v873 = vmul.f32 %v578, 0.70710677
    %v874 = vmul.f32 %v325, 0.70710677
    %v875 = vmul.f32 %v327, 0.70710677
    %v876 = vmul.f32 %v582, 0.70710677
    %v877 = vmul.f32 %v584, 0.70710677
    %v878 = vmul.f32 %v331, 0.70710677
    %v879 = vmul.f32 %v333, 0.70710677
    %v880 = vmul.f32 %v588, 0.70710677
    %v881 = vmul.f32 %v590, 0.70710677
    %v882 = vmul.f32 %v337, 0.70710677
    %v883 = vmul.f32 %v339, 0.70710677
    %v884 = vmul.f32 %v594, 0.70710677
    %v885 = vmul.f32 %v596, 0.70710677
    %v886 = vmul.f32 %v343, 0.70710677
    %v887 = vmul.f32 %v345, 0.70710677
    %v888 = vmul.f32 %v600, 0.70710677
    %v889 = vmul.f32 %v602, 0.70710677
    %v890 = vmul.f32 %v349, 0.70710677
    %v891 = vmul.f32 %v351, 0.70710677
    %v892 = vmul.f32 %v606, 0.70710677
    %v893 = vmul.f32 %v608, 0.70710677
    %v894 = vmul.f32 %v355, 0.70710677
    %v895 = vmul.f32 %v357, 0.70710677
    %v896 = vmul.f32 %v612, 0.70710677
    %v897 = vmul.f32 %v614, 0.70710677
    %v898 = vmul.f32 %v361, 0.70710677
    %v899 = vmul.f32 %v363, 0.70710677
    %v900 = vmul.f32 %v618, 0.70710677
    %v901 = vmul.f32 %v620, 0.70710677
    %v902 = vmul.f32 %v367, 0.70710677
    %v903 = vmul.f32 %v369, 0.70710677
    %v904 = vmul.f32 %v624, 0.70710677
    %v905 = vmul.f32 %v626, 0.70710677
    %v906 = vmul.f32 %v373, 0.70710677
    %v907 = vmul.f32 %v375, 0.70710677
    %v908 = vmul.f32 %v630, 0.70710677
    %v909 = vmul.f32 %v632, 0.70710677
    %v910 = vmul.f32 %v379, 0.70710677
    %v911 = vmul.f32 %v381, 0.70710677
    %v912 = vmul.f32 %v636, 0.70710677
    %v913 = vmul.f32 %v638, 0.70710677
    %v914 = vmul.f32 %v385, 0.70710677
    %v915 = vmul.f32 %v387, 0.70710677
    %v916 = vmul.f32 %v642, 0.70710677
    %v917 = vmul.f32 %v644, 0.70710677
    %v918 = vmul.f32 %v391, 0.70710677
    %v919 = vmul.f32 %v393, 0.70710677
    %v920 = vmul.f32 %v648, 0.70710677
    %v921 = vmul.f32 %v650, 0.70710677
    %v922 = vmul.f32 %v397, 0.70710677
    %v923 = vmul.f32 %v399, 0.70710677
    %v924 = vmul.f32 %v654, 0.70710677
    %v925 = vmul.f32 %v656, 0.70710677
    %v926 = vmul.f32 %v403, 0.70710677
    %v927 = vmul.f32 %v405, 0.70710677
    %v928 = vmul.f32 %v660, 0.70710677
    %v929 = vmul.f32 %v662, 0.70710677
    %v930 = vmul.f32 %v409, 0.70710677
    %v931 = vmul.f32 %v411, 0.70710677
    %v932 = vmul.f32 %v666, 0.70710677
    %v933 = vmul.f32 %v668, 0.70710677
    %v934 = vmul.f32 %v415, 0.70710677
    %v935 = vmul.f32 %v417, 0.70710677
    %v936 = vmul.f32 %v672, 0.70710677
    %v937 = vmul.f32 %v674, 0.70710677
    %v938 = vmul.f32 %v421, 0.70710677
    %v939 = vmul.f32 %v423, 0.70710677
    %v940 = vmul.f32 %v678, 0.70710677
    %v941 = vmul.f32 %v680, 0.70710677
    %v942 = vmul.f32 %v427, 0.70710677
    %v943 = vmul.f32 %v429, 0.70710677
    %v944 = vmul.f32 %v684, 0.70710677
    %v945 = vmul.f32 %v686, 0.70710677
    %v946 = vmul.f32 %v433, 0.70710677
    %v947 = vmul.f32 %v435, 0.70710677
    %v948 = vmul.f32 %v690, 0.70710677
    %v949 = vmul.f32 %v692, 0.70710677
    %v950 = verf.f32.pop %v822
    %v951 = verf.f32.pop %v823
    %v952 = verf.f32.pop %v824
    %v953 = verf.f32.pop %v825
    %v954 = verf.f32.pop %v826
    %v955 = verf.f32.pop %v827
    %v956 = verf.f32.pop %v828
    %v957 = verf.f32.pop %v829
    %v958 = verf.f32.pop %v830
    %v959 = verf.f32.pop %v831
    %v960 = verf.f32.pop %v832
    %v961 = verf.f32.pop %v833
    %v962 = verf.f32.pop %v834
    %v963 = verf.f32.pop %v835
    %v964 = verf.f32.pop %v836
    %v965 = verf.f32.pop %v837
    %v966 = verf.f32.pop %v838
    %v967 = verf.f32.pop %v839
    %v968 = verf.f32.pop %v840
    %v969 = verf.f32.pop %v841
    %v970 = verf.f32.pop %v842
    %v971 = verf.f32.pop %v843
    %v972 = verf.f32.pop %v844
    %v973 = verf.f32.pop %v845
    %v974 = verf.f32.pop %v846
    %v975 = verf.f32.pop %v847
    %v976 = verf.f32.pop %v848
    %v977 = verf.f32.pop %v849
    %v978 = verf.f32.pop %v850
    %v979 = verf.f32.pop %v851
    %v980 = verf.f32.pop %v852
    %v981 = verf.f32.pop %v853
    %v982 = verf.f32.pop %v854
    %v983 = verf.f32.pop %v855
    %v984 = verf.f32.pop %v856
    %v985 = verf.f32.pop %v857
    %v986 = verf.f32.pop %v858
    %v987 = verf.f32.pop %v859
    %v988 = verf.f32.pop %v860
    %v989 = verf.f32.pop %v861
    %v990 = verf.f32.pop %v862
    %v991 = verf.f32.pop %v863
    %v992 = verf.f32.pop %v864
    %v993 = verf.f32.pop %v865
    %v994 = verf.f32.pop %v866
    %v995 = verf.f32.pop %v867
    %v996 = verf.f32.pop %v868
    %v997 = verf.f32.pop %v869
    %v998 = verf.f32.pop %v870
    %v999 = verf.f32.pop %v871
    %v1000 = verf.f32.pop %v872
    %v1001 = verf.f32.pop %v873
    %v1002 = verf.f32.pop %v874
    %v1003 = verf.f32.pop %v875
    %v1004 = verf.f32.pop %v876
    %v1005 = verf.f32.pop %v877
    %v1006 = verf.f32.pop %v878
    %v1007 = verf.f32.pop %v879
    %v1008 = verf.f32.pop %v880
    %v1009 = verf.f32.pop %v881
    %v1010 = verf.f32.pop %v882
    %v1011 = verf.f32.pop %v883
    %v1012 = verf.f32.pop %v884
    %v1013 = verf.f32.pop %v885
    %v1014 = verf.f32.pop %v886
    %v1015 = verf.f32.pop %v887
    %v1016 = verf.f32.pop %v888
    %v1017 = verf.f32.pop %v889
    %v1018 = verf.f32.pop %v890
    %v1019 = verf.f32.pop %v891
    %v1020 = verf.f32.pop %v892
    %v1021 = verf.f32.pop %v893
    %v1022 = verf.f32.pop %v894
    %v1023 = verf.f32.pop %v895
    %v1024 = verf.f32.pop %v896
    %v1025 = verf.f32.pop %v897
    %v1026 = verf.f32.pop %v898
    %v1027 = verf.f32.pop %v899
    %v1028 = verf.f32.pop %v900
    %v1029 = verf.f32.pop %v901
    %v1030 = verf.f32.pop %v902
    %v1031 = verf.f32.pop %v903
    %v1032 = verf.f32.pop %v904
    %v1033 = verf.f32.pop %v905
    %v1034 = verf.f32.pop %v906
    %v1035 = verf.f32.pop %v907
    %v1036 = verf.f32.pop %v908
    %v1037 = verf.f32.pop %v909
    %v1038 = verf.f32.pop %v910
    %v1039 = verf.f32.pop %v911
    %v1040 = verf.f32.pop %v912
    %v1041 = verf.f32.pop %v913
    %v1042 = verf.f32.pop %v914
    %v1043 = verf.f32.pop %v915
    %v1044 = verf.f32.pop %v916
    %v1045 = verf.f32.pop %v917
    %v1046 = verf.f32.pop %v918
    %v1047 = verf.f32.pop %v919
    %v1048 = verf.f32.pop %v920
    %v1049 = verf.f32.pop %v921
    %v1050 = verf.f32.pop %v922
    %v1051 = verf.f32.pop %v923
    %v1052 = verf.f32.pop %v924
    %v1053 = verf.f32.pop %v925
    %v1054 = verf.f32.pop %v926
    %v1055 = verf.f32.pop %v927
    %v1056 = verf.f32.pop %v928
    %v1057 = verf.f32.pop %v929
    %v1058 = verf.f32.pop %v930
    %v1059 = verf.f32.pop %v931
    %v1060 = verf.f32.pop %v932
    %v1061 = verf.f32.pop %v933
    %v1062 = verf.f32.pop %v934
    %v1063 = verf.f32.pop %v935
    %v1064 = verf.f32.pop %v936
    %v1065 = verf.f32.pop %v937
    %v1066 = verf.f32.pop %v938
    %v1067 = verf.f32.pop %v939
    %v1068 = verf.f32.pop %v940
    %v1069 = verf.f32.pop %v941
    %v1070 = verf.f32.pop %v942
    %v1071 = verf.f32.pop %v943
    %v1072 = verf.f32.pop %v944
    %v1073 = verf.f32.pop %v945
    %v1074 = verf.f32.pop %v946
    %v1075 = verf.f32.pop %v947
    %v1076 = verf.f32.pop %v948
    %v1077 = verf.f32.pop %v949
    %v1078 = vadd.f32 %v950, 1.0
    %v1079 = vadd.f32 %v951, 1.0
    %v1080 = vadd.f32 %v952, 1.0
    %v1081 = vadd.f32 %v953, 1.0
    %v1082 = vadd.f32 %v954, 1.0
    %v1083 = vadd.f32 %v955, 1.0
    %v1084 = vadd.f32 %v956, 1.0
    %v1085 = vadd.f32 %v957, 1.0
    %v1086 = vadd.f32 %v958, 1.0
    %v1087 = vadd.f32 %v959, 1.0
    %v1088 = vadd.f32 %v960, 1.0
    %v1089 = vadd.f32 %v961, 1.0
    %v1090 = vadd.f32 %v962, 1.0
    %v1091 = vadd.f32 %v963, 1.0
    %v1092 = vadd.f32 %v964, 1.0
    %v1093 = vadd.f32 %v965, 1.0
    %v1094 = vadd.f32 %v966, 1.0
    %v1095 = vadd.f32 %v967, 1.0
    %v1096 = vadd.f32 %v968, 1.0
    %v1097 = vadd.f32 %v969, 1.0
    %v1098 = vadd.f32 %v970, 1.0
    %v1099 = vadd.f32 %v971, 1.0
    %v1100 = vadd.f32 %v972, 1.0
    %v1101 = vadd.f32 %v973, 1.0
    %v1102 = vadd.f32 %v974, 1.0
    %v1103 = vadd.f32 %v975, 1.0
    %v1104 = vadd.f32 %v976, 1.0
    %v1105 = vadd.f32 %v977, 1.0
    %v1106 = vadd.f32 %v978, 1.0
    %v1107 = vadd.f32 %v979, 1.0
    %v1108 = vadd.f32 %v980, 1.0
    %v1109 = vadd.f32 %v981, 1.0
    %v1110 = vadd.f32 %v982, 1.0
    %v1111 = vadd.f32 %v983, 1.0
    %v1112 = vadd.f32 %v984, 1.0
    %v1113 = vadd.f32 %v985, 1.0
    %v1114 = vadd.f32 %v986, 1.0
    %v1115 = vadd.f32 %v987, 1.0
    %v1116 = vadd.f32 %v988, 1.0
    %v1117 = vadd.f32 %v989, 1.0
    %v1118 = vadd.f32 %v990, 1.0
    %v1119 = vadd.f32 %v991, 1.0
    %v1120 = vadd.f32 %v992, 1.0
    %v1121 = vadd.f32 %v993, 1.0
    %v1122 = vadd.f32 %v994, 1.0
    %v1123 = vadd.f32 %v995, 1.0
    %v1124 = vadd.f32 %v996, 1.0
    %v1125 = vadd.f32 %v997, 1.0
    %v1126 = vadd.f32 %v998, 1.0
    %v1127 = vadd.f32 %v999, 1.0
    %v1128 = vadd.f32 %v1000, 1.0
    %v1129 = vadd.f32 %v1001, 1.0
    %v1130 = vadd.f32 %v1002, 1.0
    %v1131 = vadd.f32 %v1003, 1.0
    %v1132 = vadd.f32 %v1004, 1.0
    %v1133 = vadd.f32 %v1005, 1.0
    %v1134 = vadd.f32 %v1006, 1.0
    %v1135 = vadd.f32 %v1007, 1.0
    %v1136 = vadd.f32 %v1008, 1.0
    %v1137 = vadd.f32 %v1009, 1.0
    %v1138 = vadd.f32 %v1010, 1.0
    %v1139 = vadd.f32 %v1011, 1.0
    %v1140 = vadd.f32 %v1012, 1.0
    %v1141 = vadd.f32 %v1013, 1.0
    %v1142 = vadd.f32 %v1014, 1.0
    %v1143 = vadd.f32 %v1015, 1.0
    %v1144 = vadd.f32 %v1016, 1.0
    %v1145 = vadd.f32 %v1017, 1.0
    %v1146 = vadd.f32 %v1018, 1.0
    %v1147 = vadd.f32 %v1019, 1.0
    %v1148 = vadd.f32 %v1020, 1.0
    %v1149 = vadd.f32 %v1021, 1.0
    %v1150 = vadd.f32 %v1022, 1.0
    %v1151 = vadd.f32 %v1023, 1.0
    %v1152 = vadd.f32 %v1024, 1.0
    %v1153 = vadd.f32 %v1025, 1.0
    %v1154 = vadd.f32 %v1026, 1.0
    %v1155 = vadd.f32 %v1027, 1.0
    %v1156 = vadd.f32 %v1028, 1.0
    %v1157 = vadd.f32 %v1029, 1.0
    %v1158 = vadd.f32 %v1030, 1.0
    %v1159 = vadd.f32 %v1031, 1.0
    %v1160 = vadd.f32 %v1032, 1.0
    %v1161 = vadd.f32 %v1033, 1.0
    %v1162 = vadd.f32 %v1034, 1.0
    %v1163 = vadd.f32 %v1035, 1.0
    %v1164 = vadd.f32 %v1036, 1.0
    %v1165 = vadd.f32 %v1037, 1.0
    %v1166 = vadd.f32 %v1038, 1.0
    %v1167 = vadd.f32 %v1039, 1.0
    %v1168 = vadd.f32 %v1040, 1.0
    %v1169 = vadd.f32 %v1041, 1.0
    %v1170 = vadd.f32 %v1042, 1.0
    %v1171 = vadd.f32 %v1043, 1.0
    %v1172 = vadd.f32 %v1044, 1.0
    %v1173 = vadd.f32 %v1045, 1.0
    %v1174 = vadd.f32 %v1046, 1.0
    %v1175 = vadd.f32 %v1047, 1.0
    %v1176 = vadd.f32 %v1048, 1.0
    %v1177 = vadd.f32 %v1049, 1.0
    %v1178 = vadd.f32 %v1050, 1.0
    %v1179 = vadd.f32 %v1051, 1.0
    %v1180 = vadd.f32 %v1052, 1.0
    %v1181 = vadd.f32 %v1053, 1.0
    %v1182 = vadd.f32 %v1054, 1.0
    %v1183 = vadd.f32 %v1055, 1.0
    %v1184 = vadd.f32 %v1056, 1.0
    %v1185 = vadd.f32 %v1057, 1.0
    %v1186 = vadd.f32 %v1058, 1.0
    %v1187 = vadd.f32 %v1059, 1.0
    %v1188 = vadd.f32 %v1060, 1.0
    %v1189 = vadd.f32 %v1061, 1.0
    %v1190 = vadd.f32 %v1062, 1.0
    %v1191 = vadd.f32 %v1063, 1.0
    %v1192 = vadd.f32 %v1064, 1.0
    %v1193 = vadd.f32 %v1065, 1.0
    %v1194 = vadd.f32 %v1066, 1.0
    %v1195 = vadd.f32 %v1067, 1.0
    %v1196 = vadd.f32 %v1068, 1.0
    %v1197 = vadd.f32 %v1069, 1.0
    %v1198 = vadd.f32 %v1070, 1.0
    %v1199 = vadd.f32 %v1071, 1.0
    %v1200 = vadd.f32 %v1072, 1.0
    %v1201 = vadd.f32 %v1073, 1.0
    %v1202 = vadd.f32 %v1074, 1.0
    %v1203 = vadd.f32 %v1075, 1.0
    %v1204 = vadd.f32 %v1076, 1.0
    %v1205 = vadd.f32 %v1077, 1.0
    %v1206 = vmul.f32 %v694, %v1078
    %v1207 = vmul.f32 %v695, %v1079
    %v1208 = vmul.f32 %v696, %v1080
    %v1209 = vmul.f32 %v697, %v1081
    %v1210 = vmul.f32 %v698, %v1082
    %v1211 = vmul.f32 %v699, %v1083
    %v1212 = vmul.f32 %v700, %v1084
    %v1213 = vmul.f32 %v701, %v1085
    %v1214 = vmul.f32 %v702, %v1086
    %v1215 = vmul.f32 %v703, %v1087
    %v1216 = vmul.f32 %v704, %v1088
    %v1217 = vmul.f32 %v705, %v1089
    %v1218 = vmul.f32 %v706, %v1090
    %v1219 = vmul.f32 %v707, %v1091
    %v1220 = vmul.f32 %v708, %v1092
    %v1221 = vmul.f32 %v709, %v1093
    %v1222 = vmul.f32 %v710, %v1094
    %v1223 = vmul.f32 %v711, %v1095
    %v1224 = vmul.f32 %v712, %v1096
    %v1225 = vmul.f32 %v713, %v1097
    %v1226 = vmul.f32 %v714, %v1098
    %v1227 = vmul.f32 %v715, %v1099
    %v1228 = vmul.f32 %v716, %v1100
    %v1229 = vmul.f32 %v717, %v1101
    %v1230 = vmul.f32 %v718, %v1102
    %v1231 = vmul.f32 %v719, %v1103
    %v1232 = vmul.f32 %v720, %v1104
    %v1233 = vmul.f32 %v721, %v1105
    %v1234 = vmul.f32 %v722, %v1106
    %v1235 = vmul.f32 %v723, %v1107
    %v1236 = vmul.f32 %v724, %v1108
    %v1237 = vmul.f32 %v725, %v1109
    %v1238 = vmul.f32 %v726, %v1110
    %v1239 = vmul.f32 %v727, %v1111
    %v1240 = vmul.f32 %v728, %v1112
    %v1241 = vmul.f32 %v729, %v1113
    %v1242 = vmul.f32 %v730, %v1114
    %v1243 = vmul.f32 %v731, %v1115
    %v1244 = vmul.f32 %v732, %v1116
    %v1245 = vmul.f32 %v733, %v1117
    %v1246 = vmul.f32 %v734, %v1118
    %v1247 = vmul.f32 %v735, %v1119
    %v1248 = vmul.f32 %v736, %v1120
    %v1249 = vmul.f32 %v737, %v1121
    %v1250 = vmul.f32 %v738, %v1122
    %v1251 = vmul.f32 %v739, %v1123
    %v1252 = vmul.f32 %v740, %v1124
    %v1253 = vmul.f32 %v741, %v1125
    %v1254 = vmul.f32 %v742, %v1126
    %v1255 = vmul.f32 %v743, %v1127
    %v1256 = vmul.f32 %v744, %v1128
    %v1257 = vmul.f32 %v745, %v1129
    %v1258 = vmul.f32 %v746, %v1130
    %v1259 = vmul.f32 %v747, %v1131
    %v1260 = vmul.f32 %v748, %v1132
    %v1261 = vmul.f32 %v749, %v1133
    %v1262 = vmul.f32 %v750, %v1134
    %v1263 = vmul.f32 %v751, %v1135
    %v1264 = vmul.f32 %v752, %v1136
    %v1265 = vmul.f32 %v753, %v1137
    %v1266 = vmul.f32 %v754, %v1138
    %v1267 = vmul.f32 %v755, %v1139
    %v1268 = vmul.f32 %v756, %v1140
    %v1269 = vmul.f32 %v757, %v1141
    %v1270 = vmul.f32 %v758, %v1142
    %v1271 = vmul.f32 %v759, %v1143
    %v1272 = vmul.f32 %v760, %v1144
    %v1273 = vmul.f32 %v761, %v1145
    %v1274 = vmul.f32 %v762, %v1146
    %v1275 = vmul.f32 %v763, %v1147
    %v1276 = vmul.f32 %v764, %v1148
    %v1277 = vmul.f32 %v765, %v1149
    %v1278 = vmul.f32 %v766, %v1150
    %v1279 = vmul.f32 %v767, %v1151
    %v1280 = vmul.f32 %v768, %v1152
    %v1281 = vmul.f32 %v769, %v1153
    %v1282 = vmul.f32 %v770, %v1154
    %v1283 = vmul.f32 %v771, %v1155
    %v1284 = vmul.f32 %v772, %v1156
    %v1285 = vmul.f32 %v773, %v1157
    %v1286 = vmul.f32 %v774, %v1158
    %v1287 = vmul.f32 %v775, %v1159
    %v1288 = vmul.f32 %v776, %v1160
    %v1289 = vmul.f32 %v777, %v1161
    %v1290 = vmul.f32 %v778, %v1162
    %v1291 = vmul.f32 %v779, %v1163
    %v1292 = vmul.f32 %v780, %v1164
    %v1293 = vmul.f32 %v781, %v1165
    %v1294 = vmul.f32 %v782, %v1166
    %v1295 = vmul.f32 %v783, %v1167
    %v1296 = vmul.f32 %v784, %v1168
    %v1297 = vmul.f32 %v785, %v1169
    %v1298 = vmul.f32 %v786, %v1170
    %v1299 = vmul.f32 %v787, %v1171
    %v1300 = vmul.f32 %v788, %v1172
    %v1301 = vmul.f32 %v789, %v1173
    %v1302 = vmul.f32 %v790, %v1174
    %v1303 = vmul.f32 %v791, %v1175
    %v1304 = vmul.f32 %v792, %v1176
    %v1305 = vmul.f32 %v793, %v1177
    %v1306 = vmul.f32 %v794, %v1178
    %v1307 = vmul.f32 %v795, %v1179
    %v1308 = vmul.f32 %v796, %v1180
    %v1309 = vmul.f32 %v797, %v1181
    %v1310 = vmul.f32 %v798, %v1182
    %v1311 = vmul.f32 %v799, %v1183
    %v1312 = vmul.f32 %v800, %v1184
    %v1313 = vmul.f32 %v801, %v1185
    %v1314 = vmul.f32 %v802, %v1186
    %v1315 = vmul.f32 %v803, %v1187
    %v1316 = vmul.f32 %v804, %v1188
    %v1317 = vmul.f32 %v805, %v1189
    %v1318 = vmul.f32 %v806, %v1190
    %v1319 = vmul.f32 %v807, %v1191
    %v1320 = vmul.f32 %v808, %v1192
    %v1321 = vmul.f32 %v809, %v1193
    %v1322 = vmul.f32 %v810, %v1194
    %v1323 = vmul.f32 %v811, %v1195
    %v1324 = vmul.f32 %v812, %v1196
    %v1325 = vmul.f32 %v813, %v1197
    %v1326 = vmul.f32 %v814, %v1198
    %v1327 = vmul.f32 %v815, %v1199
    %v1328 = vmul.f32 %v816, %v1200
    %v1329 = vmul.f32 %v817, %v1201
    %v1330 = vmul.f32 %v818, %v1202
    %v1331 = vmul.f32 %v819, %v1203
    %v1332 = vmul.f32 %v820, %v1204
    %v1333 = vmul.f32 %v821, %v1205
    %v1334 = vld [vmem:[#allocation7] sm:$0xff]
    %v1335 = vld [vmem:[#allocation7 + $0x8] sm:$0xff]
    %v1336 = vld [vmem:[#allocation7 + $0x10] sm:$0xff]
    %v1337 = vld [vmem:[#allocation7 + $0x18] sm:$0xff]
    %v1338 = vld [vmem:[#allocation7 + $0x20] sm:$0xff]
    %v1339 = vld [vmem:[#allocation7 + $0x28] sm:$0xff]
    %v1340 = vld [vmem:[#allocation7 + $0x30] sm:$0xff]
    %v1341 = vld [vmem:[#allocation7 + $0x38] sm:$0xff]
    %v1342 = vld [vmem:[#allocation7 + $0x40] sm:$0xff]
    %v1343 = vld [vmem:[#allocation7 + $0x48] sm:$0xff]
    %v1344 = vld [vmem:[#allocation7 + $0x50] sm:$0xff]
    %v1345 = vld [vmem:[#allocation7 + $0x58] sm:$0xff]
    %v1346 = vld [vmem:[#allocation7 + $0x60] sm:$0xff]
    %v1347 = vld [vmem:[#allocation7 + $0x68] sm:$0xff]
    %v1348 = vld [vmem:[#allocation7 + $0x70] sm:$0xff]
    %v1349 = vld [vmem:[#allocation7 + $0x78] sm:$0xff]
    %v1350 = vld [vmem:[#allocation7 + $0x80] sm:$0xff]
    %v1351 = vld [vmem:[#allocation7 + $0x88] sm:$0xff]
    %v1352 = vld [vmem:[#allocation7 + $0x90] sm:$0xff]
    %v1353 = vld [vmem:[#allocation7 + $0x98] sm:$0xff]
    %v1354 = vld [vmem:[#allocation7 + $0xa0] sm:$0xff]
    %v1355 = vld [vmem:[#allocation7 + $0xa8] sm:$0xff]
    %v1356 = vld [vmem:[#allocation7 + $0xb0] sm:$0xff]
    %v1357 = vld [vmem:[#allocation7 + $0xb8] sm:$0xff]
    %v1358 = vld [vmem:[#allocation7 + $0xc0] sm:$0xff]
    %v1359 = vld [vmem:[#allocation7 + $0xc8] sm:$0xff]
    %v1360 = vld [vmem:[#allocation7 + $0xd0] sm:$0xff]
    %v1361 = vld [vmem:[#allocation7 + $0xd8] sm:$0xff]
    %v1362 = vld [vmem:[#allocation7 + $0xe0] sm:$0xff]
    %v1363 = vld [vmem:[#allocation7 + $0xe8] sm:$0xff]
    %v1364 = vld [vmem:[#allocation7 + $0xf0] sm:$0xff]
    %v1365 = vld [vmem:[#allocation7 + $0xf8] sm:$0xff]
    %v1366 = vld [vmem:[#allocation7 + $0x100] sm:$0xff]
    %v1367 = vld [vmem:[#allocation7 + $0x108] sm:$0xff]
    %v1368 = vld [vmem:[#allocation7 + $0x110] sm:$0xff]
    %v1369 = vld [vmem:[#allocation7 + $0x118] sm:$0xff]
    %v1370 = vld [vmem:[#allocation7 + $0x120] sm:$0xff]
    %v1371 = vld [vmem:[#allocation7 + $0x128] sm:$0xff]
    %v1372 = vld [vmem:[#allocation7 + $0x130] sm:$0xff]
    %v1373 = vld [vmem:[#allocation7 + $0x138] sm:$0xff]
    %v1374 = vld [vmem:[#allocation7 + $0x140] sm:$0xff]
    %v1375 = vld [vmem:[#allocation7 + $0x148] sm:$0xff]
    %v1376 = vld [vmem:[#allocation7 + $0x150] sm:$0xff]
    %v1377 = vld [vmem:[#allocation7 + $0x158] sm:$0xff]
    %v1378 = vld [vmem:[#allocation7 + $0x160] sm:$0xff]
    %v1379 = vld [vmem:[#allocation7 + $0x168] sm:$0xff]
    %v1380 = vld [vmem:[#allocation7 + $0x170] sm:$0xff]
    %v1381 = vld [vmem:[#allocation7 + $0x178] sm:$0xff]
    %v1382 = vld [vmem:[#allocation7 + $0x180] sm:$0xff]
    %v1383 = vld [vmem:[#allocation7 + $0x188] sm:$0xff]
    %v1384 = vld [vmem:[#allocation7 + $0x190] sm:$0xff]
    %v1385 = vld [vmem:[#allocation7 + $0x198] sm:$0xff]
    %v1386 = vld [vmem:[#allocation7 + $0x1a0] sm:$0xff]
    %v1387 = vld [vmem:[#allocation7 + $0x1a8] sm:$0xff]
    %v1388 = vld [vmem:[#allocation7 + $0x1b0] sm:$0xff]
    %v1389 = vld [vmem:[#allocation7 + $0x1b8] sm:$0xff]
    %v1390 = vld [vmem:[#allocation7 + $0x1c0] sm:$0xff]
    %v1391 = vld [vmem:[#allocation7 + $0x1c8] sm:$0xff]
    %v1392 = vld [vmem:[#allocation7 + $0x1d0] sm:$0xff]
    %v1393 = vld [vmem:[#allocation7 + $0x1d8] sm:$0xff]
    %v1394 = vld [vmem:[#allocation7 + $0x1e0] sm:$0xff]
    %v1395 = vld [vmem:[#allocation7 + $0x1e8] sm:$0xff]
    %v1396 = vld [vmem:[#allocation7 + $0x1f0] sm:$0xff]
    %v1397 = vld [vmem:[#allocation7 + $0x1f8] sm:$0xff]
    %v1398 = vld [vmem:[%s4] sm:$0x1]
    %v1400 = vlaneseq
    %v1401 = vshrl.u32 %v1400, 7
    %v1402 = vsub.s32 0, %v1401
    %v1403 = vrot.slane %v1398, %v1402
    %1405 = vmatprep.subr.mxu0 0.0
    %1406 = vmatpush1.msra.mxu0 %v1349
    %1407 = vmatprep.subr.mxu0 0.0
    %1408 = vmatpush1.msra.mxu0 %v1348
    %1409 = vmatprep.subr.mxu0 0.0
    %1410 = vmatpush1.msra.mxu0 %v1347
    %1411 = vmatprep.subr.mxu0 0.0
    %1412 = vmatpush1.msra.mxu0 %v1346
    %1413 = vmatprep.subr.mxu0 0.0
    %1414 = vmatpush1.msra.mxu0 %v1345
    %1415 = vmatprep.subr.mxu0 0.0
    %1416 = vmatpush1.msra.mxu0 %v1344
    %1417 = vmatprep.subr.mxu0 0.0
    %1418 = vmatpush1.msra.mxu0 %v1343
    %1419 = vmatprep.subr.mxu0 0.0
    %1420 = vmatpush1.msra.mxu0 %v1342
    %1421 = vmatprep.subr.mxu0 0.0
    %1422 = vmatpush1.msra.mxu0 %v1341
    %1423 = vmatprep.subr.mxu0 0.0
    %1424 = vmatpush1.msra.mxu0 %v1340
    %1425 = vmatprep.subr.mxu0 0.0
    %1426 = vmatpush1.msra.mxu0 %v1339
    %1427 = vmatprep.subr.mxu0 0.0
    %1428 = vmatpush1.msra.mxu0 %v1338
    %1429 = vmatprep.subr.mxu0 0.0
    %1430 = vmatpush1.msra.mxu0 %v1337
    %1431 = vmatprep.subr.mxu0 0.0
    %1432 = vmatpush1.msra.mxu0 %v1336
    %1433 = vmatprep.subr.mxu0 0.0
    %1434 = vmatpush1.msra.mxu0 %v1335
    %1435 = vmatprep.subr.mxu0 0.0
    %1436 = vmatpush1.msra.mxu0 %v1334
    %1437 = vmatprep.subr.mxu0 0.0
    %1438 = vmatpush2.msra.mxu0 %v1365
    %1439 = vmatprep.subr.mxu0 0.0
    %1440 = vmatpush2.msra.mxu0 %v1364
    %1441 = vmatprep.subr.mxu0 0.0
    %1442 = vmatpush2.msra.mxu0 %v1363
    %1443 = vmatprep.subr.mxu0 0.0
    %1444 = vmatpush2.msra.mxu0 %v1362
    %1445 = vmatprep.subr.mxu0 0.0
    %1446 = vmatpush2.msra.mxu0 %v1361
    %1447 = vmatprep.subr.mxu0 0.0
    %1448 = vmatpush2.msra.mxu0 %v1360
    %1449 = vmatprep.subr.mxu0 0.0
    %1450 = vmatpush2.msra.mxu0 %v1359
    %1451 = vmatprep.subr.mxu0 0.0
    %1452 = vmatpush2.msra.mxu0 %v1358
    %1453 = vmatprep.subr.mxu0 0.0
    %1454 = vmatpush2.msra.mxu0 %v1357
    %1455 = vmatprep.subr.mxu0 0.0
    %1456 = vmatpush2.msra.mxu0 %v1356
    %1457 = vmatprep.subr.mxu0 0.0
    %1458 = vmatpush2.msra.mxu0 %v1355
    %1459 = vmatprep.subr.mxu0 0.0
    %1460 = vmatpush2.msra.mxu0 %v1354
    %1461 = vmatprep.subr.mxu0 0.0
    %1462 = vmatpush2.msra.mxu0 %v1353
    %1463 = vmatprep.subr.mxu0 0.0
    %1464 = vmatpush2.msra.mxu0 %v1352
    %1465 = vmatprep.subr.mxu0 0.0
    %1466 = vmatpush2.msra.mxu0 %v1351
    %1467 = vmatprep.subr.mxu0 0.0
    %1468 = vmatpush2.msra.mxu0 %v1350
    %1469 = vmatprep.mubr.f32.mxu0 %v1207
    %1470 = vmatmul.mubr.f32.gmra.mxu0 %v1206
    %v1471 = vpop.f32.mrf.mxu0
    %v1472 = vadd.f32 %v1403, %v1471
    %v1473 = vpop.f32.mrf.mxu0
    %1474 = vmatprep.mubr.f32.mxu0 %v1211
    %1475 = vmatmul.mubr.f32.gmra.mxu0 %v1210
    %v1476 = vpop.f32.mrf.mxu0
    %v1477 = vadd.f32 %v1403, %v1476
    %v1478 = vpop.f32.mrf.mxu0
    %1479 = vmatprep.mubr.f32.mxu0 %v1215
    %1480 = vmatmul.mubr.f32.gmra.mxu0 %v1214
    %v1481 = vpop.f32.mrf.mxu0
    %v1482 = vadd.f32 %v1403, %v1481
    %v1483 = vpop.f32.mrf.mxu0
    %1484 = vmatprep.mubr.f32.mxu0 %v1219
    %1485 = vmatmul.mubr.f32.gmra.mxu0 %v1218
    %v1486 = vpop.f32.mrf.mxu0
    %v1487 = vadd.f32 %v1403, %v1486
    %v1488 = vpop.f32.mrf.mxu0
    %1489 = vmatprep.mubr.f32.mxu0 %v1223
    %1490 = vmatmul.mubr.f32.gmra.mxu0 %v1222
    %v1491 = vpop.f32.mrf.mxu0
    %v1492 = vadd.f32 %v1403, %v1491
    %v1493 = vpop.f32.mrf.mxu0
    %1494 = vmatprep.mubr.f32.mxu0 %v1227
    %1495 = vmatmul.mubr.f32.gmra.mxu0 %v1226
    %v1496 = vpop.f32.mrf.mxu0
    %v1497 = vadd.f32 %v1403, %v1496
    %v1498 = vpop.f32.mrf.mxu0
    %1499 = vmatprep.mubr.f32.mxu0 %v1231
    %1500 = vmatmul.mubr.f32.gmra.mxu0 %v1230
    %v1501 = vpop.f32.mrf.mxu0
    %v1502 = vadd.f32 %v1403, %v1501
    %v1503 = vpop.f32.mrf.mxu0
    %1504 = vmatprep.mubr.f32.mxu0 %v1235
    %1505 = vmatmul.mubr.f32.gmra.mxu0 %v1234
    %v1506 = vpop.f32.mrf.mxu0
    %v1507 = vadd.f32 %v1403, %v1506
    %v1508 = vpop.f32.mrf.mxu0
    %1509 = vmatprep.mubr.f32.mxu0 %v1239
    %1510 = vmatmul.mubr.f32.gmra.mxu0 %v1238
    %v1511 = vpop.f32.mrf.mxu0
    %v1512 = vadd.f32 %v1403, %v1511
    %v1513 = vpop.f32.mrf.mxu0
    %1514 = vmatprep.mubr.f32.mxu0 %v1243
    %1515 = vmatmul.mubr.f32.gmra.mxu0 %v1242
    %v1516 = vpop.f32.mrf.mxu0
    %v1517 = vadd.f32 %v1403, %v1516
    %v1518 = vpop.f32.mrf.mxu0
    %1519 = vmatprep.mubr.f32.mxu0 %v1247
    %1520 = vmatmul.mubr.f32.gmra.mxu0 %v1246
    %v1521 = vpop.f32.mrf.mxu0
    %v1522 = vadd.f32 %v1403, %v1521
    %v1523 = vpop.f32.mrf.mxu0
    %1524 = vmatprep.mubr.f32.mxu0 %v1251
    %1525 = vmatmul.mubr.f32.gmra.mxu0 %v1250
    %v1526 = vpop.f32.mrf.mxu0
    %v1527 = vadd.f32 %v1403, %v1526
    %v1528 = vpop.f32.mrf.mxu0
    %1529 = vmatprep.mubr.f32.mxu0 %v1255
    %1530 = vmatmul.mubr.f32.gmra.mxu0 %v1254
    %v1531 = vpop.f32.mrf.mxu0
    %v1532 = vadd.f32 %v1403, %v1531
    %v1533 = vpop.f32.mrf.mxu0
    %1534 = vmatprep.mubr.f32.mxu0 %v1259
    %1535 = vmatmul.mubr.f32.gmra.mxu0 %v1258
    %v1536 = vpop.f32.mrf.mxu0
    %v1537 = vadd.f32 %v1403, %v1536
    %v1538 = vpop.f32.mrf.mxu0
    %1539 = vmatprep.mubr.f32.mxu0 %v1263
    %1540 = vmatmul.mubr.f32.gmra.mxu0 %v1262
    %v1541 = vpop.f32.mrf.mxu0
    %v1542 = vadd.f32 %v1403, %v1541
    %v1543 = vpop.f32.mrf.mxu0
    %1544 = vmatprep.mubr.f32.mxu0 %v1267
    %1545 = vmatmul.mubr.f32.gmra.mxu0 %v1266
    %v1546 = vpop.f32.mrf.mxu0
    %v1547 = vadd.f32 %v1403, %v1546
    %v1548 = vpop.f32.mrf.mxu0
    %1549 = vmatprep.mubr.f32.mxu0 %v1271
    %1550 = vmatmul.mubr.f32.gmra.mxu0 %v1270
    %v1551 = vpop.f32.mrf.mxu0
    %v1552 = vadd.f32 %v1403, %v1551
    %v1553 = vpop.f32.mrf.mxu0
    %1554 = vmatprep.mubr.f32.mxu0 %v1275
    %1555 = vmatmul.mubr.f32.gmra.mxu0 %v1274
    %v1556 = vpop.f32.mrf.mxu0
    %v1557 = vadd.f32 %v1403, %v1556
    %v1558 = vpop.f32.mrf.mxu0
    %1559 = vmatprep.mubr.f32.mxu0 %v1279
    %1560 = vmatmul.mubr.f32.gmra.mxu0 %v1278
    %v1561 = vpop.f32.mrf.mxu0
    %v1562 = vadd.f32 %v1403, %v1561
    %v1563 = vpop.f32.mrf.mxu0
    %1564 = vmatprep.mubr.f32.mxu0 %v1283
    %1565 = vmatmul.mubr.f32.gmra.mxu0 %v1282
    %v1566 = vpop.f32.mrf.mxu0
    %v1567 = vadd.f32 %v1403, %v1566
    %v1568 = vpop.f32.mrf.mxu0
    %1569 = vmatprep.mubr.f32.mxu0 %v1287
    %1570 = vmatmul.mubr.f32.gmra.mxu0 %v1286
    %v1571 = vpop.f32.mrf.mxu0
    %v1572 = vadd.f32 %v1403, %v1571
    %v1573 = vpop.f32.mrf.mxu0
    %1574 = vmatprep.mubr.f32.mxu0 %v1291
    %1575 = vmatmul.mubr.f32.gmra.mxu0 %v1290
    %v1576 = vpop.f32.mrf.mxu0
    %v1577 = vadd.f32 %v1403, %v1576
    %v1578 = vpop.f32.mrf.mxu0
    %1579 = vmatprep.mubr.f32.mxu0 %v1295
    %1580 = vmatmul.mubr.f32.gmra.mxu0 %v1294
    %v1581 = vpop.f32.mrf.mxu0
    %v1582 = vadd.f32 %v1403, %v1581
    %v1583 = vpop.f32.mrf.mxu0
    %1584 = vmatprep.mubr.f32.mxu0 %v1299
    %1585 = vmatmul.mubr.f32.gmra.mxu0 %v1298
    %v1586 = vpop.f32.mrf.mxu0
    %v1587 = vadd.f32 %v1403, %v1586
    %v1588 = vpop.f32.mrf.mxu0
    %1589 = vmatprep.mubr.f32.mxu0 %v1303
    %1590 = vmatmul.mubr.f32.gmra.mxu0 %v1302
    %v1591 = vpop.f32.mrf.mxu0
    %v1592 = vadd.f32 %v1403, %v1591
    %v1593 = vpop.f32.mrf.mxu0
    %1594 = vmatprep.mubr.f32.mxu0 %v1307
    %1595 = vmatmul.mubr.f32.gmra.mxu0 %v1306
    %v1596 = vpop.f32.mrf.mxu0
    %v1597 = vadd.f32 %v1403, %v1596
    %v1598 = vpop.f32.mrf.mxu0
    %1599 = vmatprep.mubr.f32.mxu0 %v1311
    %1600 = vmatmul.mubr.f32.gmra.mxu0 %v1310
    %v1601 = vpop.f32.mrf.mxu0
    %v1602 = vadd.f32 %v1403, %v1601
    %v1603 = vpop.f32.mrf.mxu0
    %1604 = vmatprep.mubr.f32.mxu0 %v1315
    %1605 = vmatmul.mubr.f32.gmra.mxu0 %v1314
    %v1606 = vpop.f32.mrf.mxu0
    %v1607 = vadd.f32 %v1403, %v1606
    %v1608 = vpop.f32.mrf.mxu0
    %1609 = vmatprep.mubr.f32.mxu0 %v1319
    %1610 = vmatmul.mubr.f32.gmra.mxu0 %v1318
    %v1611 = vpop.f32.mrf.mxu0
    %v1612 = vadd.f32 %v1403, %v1611
    %v1613 = vpop.f32.mrf.mxu0
    %1614 = vmatprep.mubr.f32.mxu0 %v1323
    %1615 = vmatmul.mubr.f32.gmra.mxu0 %v1322
    %v1616 = vpop.f32.mrf.mxu0
    %v1617 = vadd.f32 %v1403, %v1616
    %v1618 = vpop.f32.mrf.mxu0
    %1619 = vmatprep.mubr.f32.mxu0 %v1327
    %1620 = vmatmul.mubr.f32.gmra.mxu0 %v1326
    %v1621 = vpop.f32.mrf.mxu0
    %v1622 = vadd.f32 %v1403, %v1621
    %v1623 = vpop.f32.mrf.mxu0
    %1624 = vmatprep.mubr.f32.mxu0 %v1331
    %1625 = vmatmul.mubr.f32.gmra.mxu0 %v1330
    %v1626 = vpop.f32.mrf.mxu0
    %v1627 = vadd.f32 %v1403, %v1626
    %v1628 = vpop.f32.mrf.mxu0
    %1629 = vdwg.mxu0
    %1630 = vmatprep.subr.mxu0 0.0
    %1631 = vmatpush1.msra.mxu0 %v1381
    %1632 = vmatprep.subr.mxu0 0.0
    %1633 = vmatpush1.msra.mxu0 %v1380
    %1634 = vmatprep.subr.mxu0 0.0
    %1635 = vmatpush1.msra.mxu0 %v1379
    %1636 = vmatprep.subr.mxu0 0.0
    %1637 = vmatpush1.msra.mxu0 %v1378
    %1638 = vmatprep.subr.mxu0 0.0
    %1639 = vmatpush1.msra.mxu0 %v1377
    %1640 = vmatprep.subr.mxu0 0.0
    %1641 = vmatpush1.msra.mxu0 %v1376
    %1642 = vmatprep.subr.mxu0 0.0
    %1643 = vmatpush1.msra.mxu0 %v1375
    %1644 = vmatprep.subr.mxu0 0.0
    %1645 = vmatpush1.msra.mxu0 %v1374
    %1646 = vmatprep.subr.mxu0 0.0
    %1647 = vmatpush1.msra.mxu0 %v1373
    %1648 = vmatprep.subr.mxu0 0.0
    %1649 = vmatpush1.msra.mxu0 %v1372
    %1650 = vmatprep.subr.mxu0 0.0
    %1651 = vmatpush1.msra.mxu0 %v1371
    %1652 = vmatprep.subr.mxu0 0.0
    %1653 = vmatpush1.msra.mxu0 %v1370
    %1654 = vmatprep.subr.mxu0 0.0
    %1655 = vmatpush1.msra.mxu0 %v1369
    %1656 = vmatprep.subr.mxu0 0.0
    %1657 = vmatpush1.msra.mxu0 %v1368
    %1658 = vmatprep.subr.mxu0 0.0
    %1659 = vmatpush1.msra.mxu0 %v1367
    %1660 = vmatprep.subr.mxu0 0.0
    %1661 = vmatpush1.msra.mxu0 %v1366
    %1662 = vmatprep.subr.mxu0 0.0
    %1663 = vmatpush2.msra.mxu0 %v1397
    %1664 = vmatprep.subr.mxu0 0.0
    %1665 = vmatpush2.msra.mxu0 %v1396
    %1666 = vmatprep.subr.mxu0 0.0
    %1667 = vmatpush2.msra.mxu0 %v1395
    %1668 = vmatprep.subr.mxu0 0.0
    %1669 = vmatpush2.msra.mxu0 %v1394
    %1670 = vmatprep.subr.mxu0 0.0
    %1671 = vmatpush2.msra.mxu0 %v1393
    %1672 = vmatprep.subr.mxu0 0.0
    %1673 = vmatpush2.msra.mxu0 %v1392
    %1674 = vmatprep.subr.mxu0 0.0
    %1675 = vmatpush2.msra.mxu0 %v1391
    %1676 = vmatprep.subr.mxu0 0.0
    %1677 = vmatpush2.msra.mxu0 %v1390
    %1678 = vmatprep.subr.mxu0 0.0
    %1679 = vmatpush2.msra.mxu0 %v1389
    %1680 = vmatprep.subr.mxu0 0.0
    %1681 = vmatpush2.msra.mxu0 %v1388
    %1682 = vmatprep.subr.mxu0 0.0
    %1683 = vmatpush2.msra.mxu0 %v1387
    %1684 = vmatprep.subr.mxu0 0.0
    %1685 = vmatpush2.msra.mxu0 %v1386
    %1686 = vmatprep.subr.mxu0 0.0
    %1687 = vmatpush2.msra.mxu0 %v1385
    %1688 = vmatprep.subr.mxu0 0.0
    %1689 = vmatpush2.msra.mxu0 %v1384
    %1690 = vmatprep.subr.mxu0 0.0
    %1691 = vmatpush2.msra.mxu0 %v1383
    %1692 = vmatprep.subr.mxu0 0.0
    %1693 = vmatpush2.msra.mxu0 %v1382
    %1694 = vmatprep.mubr.f32.mxu0 %v1209
    %1695 = vmatmul.mubr.f32.gmra.mxu0 %v1208
    %v1696 = vpop.f32.mrf.mxu0
    %v1697 = vadd.f32 %v1472, %v1696
    %v1698 = vpop.f32.mrf.mxu0
    %1699 = vmatprep.mubr.f32.mxu0 %v1213
    %1700 = vmatmul.mubr.f32.gmra.mxu0 %v1212
    %v1701 = vpop.f32.mrf.mxu0
    %v1702 = vadd.f32 %v1477, %v1701
    %v1703 = vpop.f32.mrf.mxu0
    %1704 = vmatprep.mubr.f32.mxu0 %v1217
    %1705 = vmatmul.mubr.f32.gmra.mxu0 %v1216
    %v1706 = vpop.f32.mrf.mxu0
    %v1707 = vadd.f32 %v1482, %v1706
    %v1708 = vpop.f32.mrf.mxu0
    %1709 = vmatprep.mubr.f32.mxu0 %v1221
    %1710 = vmatmul.mubr.f32.gmra.mxu0 %v1220
    %v1711 = vpop.f32.mrf.mxu0
    %v1712 = vadd.f32 %v1487, %v1711
    %v1713 = vpop.f32.mrf.mxu0
    %1714 = vmatprep.mubr.f32.mxu0 %v1225
    %1715 = vmatmul.mubr.f32.gmra.mxu0 %v1224
    %v1716 = vpop.f32.mrf.mxu0
    %v1717 = vadd.f32 %v1492, %v1716
    %v1718 = vpop.f32.mrf.mxu0
    %1719 = vmatprep.mubr.f32.mxu0 %v1229
    %1720 = vmatmul.mubr.f32.gmra.mxu0 %v1228
    %v1721 = vpop.f32.mrf.mxu0
    %v1722 = vadd.f32 %v1497, %v1721
    %v1723 = vpop.f32.mrf.mxu0
    %1724 = vmatprep.mubr.f32.mxu0 %v1233
    %1725 = vmatmul.mubr.f32.gmra.mxu0 %v1232
    %v1726 = vpop.f32.mrf.mxu0
    %v1727 = vadd.f32 %v1502, %v1726
    %v1728 = vpop.f32.mrf.mxu0
    %1729 = vmatprep.mubr.f32.mxu0 %v1237
    %1730 = vmatmul.mubr.f32.gmra.mxu0 %v1236
    %v1731 = vpop.f32.mrf.mxu0
    %v1732 = vadd.f32 %v1507, %v1731
    %v1733 = vpop.f32.mrf.mxu0
    %1734 = vmatprep.mubr.f32.mxu0 %v1241
    %1735 = vmatmul.mubr.f32.gmra.mxu0 %v1240
    %v1736 = vpop.f32.mrf.mxu0
    %v1737 = vadd.f32 %v1512, %v1736
    %v1738 = vpop.f32.mrf.mxu0
    %1739 = vmatprep.mubr.f32.mxu0 %v1245
    %1740 = vmatmul.mubr.f32.gmra.mxu0 %v1244
    %v1741 = vpop.f32.mrf.mxu0
    %v1742 = vadd.f32 %v1517, %v1741
    %v1743 = vpop.f32.mrf.mxu0
    %1744 = vmatprep.mubr.f32.mxu0 %v1249
    %1745 = vmatmul.mubr.f32.gmra.mxu0 %v1248
    %v1746 = vpop.f32.mrf.mxu0
    %v1747 = vadd.f32 %v1522, %v1746
    %v1748 = vpop.f32.mrf.mxu0
    %1749 = vmatprep.mubr.f32.mxu0 %v1253
    %1750 = vmatmul.mubr.f32.gmra.mxu0 %v1252
    %v1751 = vpop.f32.mrf.mxu0
    %v1752 = vadd.f32 %v1527, %v1751
    %v1753 = vpop.f32.mrf.mxu0
    %1754 = vmatprep.mubr.f32.mxu0 %v1257
    %1755 = vmatmul.mubr.f32.gmra.mxu0 %v1256
    %v1756 = vpop.f32.mrf.mxu0
    %v1757 = vadd.f32 %v1532, %v1756
    %v1758 = vpop.f32.mrf.mxu0
    %1759 = vmatprep.mubr.f32.mxu0 %v1261
    %1760 = vmatmul.mubr.f32.gmra.mxu0 %v1260
    %v1761 = vpop.f32.mrf.mxu0
    %v1762 = vadd.f32 %v1537, %v1761
    %v1763 = vpop.f32.mrf.mxu0
    %1764 = vmatprep.mubr.f32.mxu0 %v1265
    %1765 = vmatmul.mubr.f32.gmra.mxu0 %v1264
    %v1766 = vpop.f32.mrf.mxu0
    %v1767 = vadd.f32 %v1542, %v1766
    %v1768 = vpop.f32.mrf.mxu0
    %1769 = vmatprep.mubr.f32.mxu0 %v1269
    %1770 = vmatmul.mubr.f32.gmra.mxu0 %v1268
    %v1771 = vpop.f32.mrf.mxu0
    %v1772 = vadd.f32 %v1547, %v1771
    %v1773 = vpop.f32.mrf.mxu0
    %1774 = vmatprep.mubr.f32.mxu0 %v1273
    %1775 = vmatmul.mubr.f32.gmra.mxu0 %v1272
    %v1776 = vpop.f32.mrf.mxu0
    %v1777 = vadd.f32 %v1552, %v1776
    %v1778 = vpop.f32.mrf.mxu0
    %1779 = vmatprep.mubr.f32.mxu0 %v1277
    %1780 = vmatmul.mubr.f32.gmra.mxu0 %v1276
    %v1781 = vpop.f32.mrf.mxu0
    %v1782 = vadd.f32 %v1557, %v1781
    %v1783 = vpop.f32.mrf.mxu0
    %1784 = vmatprep.mubr.f32.mxu0 %v1281
    %1785 = vmatmul.mubr.f32.gmra.mxu0 %v1280
    %v1786 = vpop.f32.mrf.mxu0
    %v1787 = vadd.f32 %v1562, %v1786
    %v1788 = vpop.f32.mrf.mxu0
    %1789 = vmatprep.mubr.f32.mxu0 %v1285
    %1790 = vmatmul.mubr.f32.gmra.mxu0 %v1284
    %v1791 = vpop.f32.mrf.mxu0
    %v1792 = vadd.f32 %v1567, %v1791
    %v1793 = vpop.f32.mrf.mxu0
    %1794 = vmatprep.mubr.f32.mxu0 %v1289
    %1795 = vmatmul.mubr.f32.gmra.mxu0 %v1288
    %v1796 = vpop.f32.mrf.mxu0
    %v1797 = vadd.f32 %v1572, %v1796
    %v1798 = vpop.f32.mrf.mxu0
    %1799 = vmatprep.mubr.f32.mxu0 %v1293
    %1800 = vmatmul.mubr.f32.gmra.mxu0 %v1292
    %v1801 = vpop.f32.mrf.mxu0
    %v1802 = vadd.f32 %v1577, %v1801
    %v1803 = vpop.f32.mrf.mxu0
    %1804 = vmatprep.mubr.f32.mxu0 %v1297
    %1805 = vmatmul.mubr.f32.gmra.mxu0 %v1296
    %v1806 = vpop.f32.mrf.mxu0
    %v1807 = vadd.f32 %v1582, %v1806
    %v1808 = vpop.f32.mrf.mxu0
    %1809 = vmatprep.mubr.f32.mxu0 %v1301
    %1810 = vmatmul.mubr.f32.gmra.mxu0 %v1300
    %v1811 = vpop.f32.mrf.mxu0
    %v1812 = vadd.f32 %v1587, %v1811
    %v1813 = vpop.f32.mrf.mxu0
    %1814 = vmatprep.mubr.f32.mxu0 %v1305
    %1815 = vmatmul.mubr.f32.gmra.mxu0 %v1304
    %v1816 = vpop.f32.mrf.mxu0
    %v1817 = vadd.f32 %v1592, %v1816
    %v1818 = vpop.f32.mrf.mxu0
    %1819 = vmatprep.mubr.f32.mxu0 %v1309
    %1820 = vmatmul.mubr.f32.gmra.mxu0 %v1308
    %v1821 = vpop.f32.mrf.mxu0
    %v1822 = vadd.f32 %v1597, %v1821
    %v1823 = vpop.f32.mrf.mxu0
    %1824 = vmatprep.mubr.f32.mxu0 %v1313
    %1825 = vmatmul.mubr.f32.gmra.mxu0 %v1312
    %v1826 = vpop.f32.mrf.mxu0
    %v1827 = vadd.f32 %v1602, %v1826
    %v1828 = vpop.f32.mrf.mxu0
    %1829 = vmatprep.mubr.f32.mxu0 %v1317
    %1830 = vmatmul.mubr.f32.gmra.mxu0 %v1316
    %v1831 = vpop.f32.mrf.mxu0
    %v1832 = vadd.f32 %v1607, %v1831
    %v1833 = vpop.f32.mrf.mxu0
    %1834 = vmatprep.mubr.f32.mxu0 %v1321
    %1835 = vmatmul.mubr.f32.gmra.mxu0 %v1320
    %v1836 = vpop.f32.mrf.mxu0
    %v1837 = vadd.f32 %v1612, %v1836
    %v1838 = vpop.f32.mrf.mxu0
    %1839 = vmatprep.mubr.f32.mxu0 %v1325
    %1840 = vmatmul.mubr.f32.gmra.mxu0 %v1324
    %v1841 = vpop.f32.mrf.mxu0
    %v1842 = vadd.f32 %v1617, %v1841
    %v1843 = vpop.f32.mrf.mxu0
    %1844 = vmatprep.mubr.f32.mxu0 %v1329
    %1845 = vmatmul.mubr.f32.gmra.mxu0 %v1328
    %v1846 = vpop.f32.mrf.mxu0
    %v1847 = vadd.f32 %v1622, %v1846
    %v1848 = vpop.f32.mrf.mxu0
    %1849 = vmatprep.mubr.f32.mxu0 %v1333
    %1850 = vmatmul.mubr.f32.gmra.mxu0 %v1332
    %v1851 = vpop.f32.mrf.mxu0
    %v1852 = vadd.f32 %v1627, %v1851
    %v1853 = vpop.f32.mrf.mxu0
    %1854 = vdwg.mxu0
    %1855 = vst [vmem:[#allocation8] sm:$0xff] %v1697
    %1856 = vst [vmem:[#allocation8 + $0x8] sm:$0xff] %v1702
    %1857 = vst [vmem:[#allocation8 + $0x10] sm:$0xff] %v1707
    %1858 = vst [vmem:[#allocation8 + $0x18] sm:$0xff] %v1712
    %1859 = vst [vmem:[#allocation8 + $0x20] sm:$0xff] %v1717
    %1860 = vst [vmem:[#allocation8 + $0x28] sm:$0xff] %v1722
    %1861 = vst [vmem:[#allocation8 + $0x30] sm:$0xff] %v1727
    %1862 = vst [vmem:[#allocation8 + $0x38] sm:$0xff] %v1732
    %1863 = vst [vmem:[#allocation8 + $0x40] sm:$0xff] %v1737
    %1864 = vst [vmem:[#allocation8 + $0x48] sm:$0xff] %v1742
    %1865 = vst [vmem:[#allocation8 + $0x50] sm:$0xff] %v1747
    %1866 = vst [vmem:[#allocation8 + $0x58] sm:$0xff] %v1752
    %1867 = vst [vmem:[#allocation8 + $0x60] sm:$0xff] %v1757
    %1868 = vst [vmem:[#allocation8 + $0x68] sm:$0xff] %v1762
    %1869 = vst [vmem:[#allocation8 + $0x70] sm:$0xff] %v1767
    %1870 = vst [vmem:[#allocation8 + $0x78] sm:$0xff] %v1772
    %1871 = vst [vmem:[#allocation8 + $0x80] sm:$0xff] %v1777
    %1872 = vst [vmem:[#allocation8 + $0x88] sm:$0xff] %v1782
    %1873 = vst [vmem:[#allocation8 + $0x90] sm:$0xff] %v1787
    %1874 = vst [vmem:[#allocation8 + $0x98] sm:$0xff] %v1792
    %1875 = vst [vmem:[#allocation8 + $0xa0] sm:$0xff] %v1797
    %1876 = vst [vmem:[#allocation8 + $0xa8] sm:$0xff] %v1802
    %1877 = vst [vmem:[#allocation8 + $0xb0] sm:$0xff] %v1807
    %1878 = vst [vmem:[#allocation8 + $0xb8] sm:$0xff] %v1812
    %1879 = vst [vmem:[#allocation8 + $0xc0] sm:$0xff] %v1817
    %1880 = vst [vmem:[#allocation8 + $0xc8] sm:$0xff] %v1822
    %1881 = vst [vmem:[#allocation8 + $0xd0] sm:$0xff] %v1827
    %1882 = vst [vmem:[#allocation8 + $0xd8] sm:$0xff] %v1832
    %1883 = vst [vmem:[#allocation8 + $0xe0] sm:$0xff] %v1837
    %1884 = vst [vmem:[#allocation8 + $0xe8] sm:$0xff] %v1842
    %1885 = vst [vmem:[#allocation8 + $0xf0] sm:$0xff] %v1847
    %1886 = vst [vmem:[#allocation8 + $0xf8] sm:$0xff] %v1852
    // Predicated region
    $region34: #{mlp_forward.1} parent=1 // pred_check
      _
    $region35: #{mlp_forward.1} parent=1 // pred_check_branch
      %1888 = sbr.rel (0) target = $region37
    $region36: #{mlp_forward.1} parent=1 // pred_region
      %s1890 = ssub.s32 4096, 4096
      %1891 = vsyncadd [#allocation4], %s1890
      %s1892 = sshll.u32 [#allocation8], 4
      %s1893 = int_to_ptr.vmem [resolvable:$true] %s1892
      %1898 = dma.vmem_to_hbm [thread:$0]  %s1893, 4096, %s5, [#allocation4], 128, 128, 8
    $region37: #{mlp_forward.1} parent=1 // pred_fallthru
      _
    // Predicated region
    $region38: #{mlp_forward.1} parent=1 // pred_check
      _
    $region39: #{mlp_forward.1} parent=1 // pred_check_branch
      %1900 = sbr.rel (0) target = $region41
    $region40: #{mlp_forward.1} parent=1 // pred_region
      %1901 = dma.done [#allocation4], 4096
    $region41: #{mlp_forward.1} parent=1 // pred_fallthru
      _
    %1902 = vsyncpa [#allocation3], 1
    %1903 = vsyncpa [#allocation6], 1
    %1904 = vsyncpa [#allocation4], 1

</llo_original>
